<compile_context>
chip_gen: v7x
topology: tpu7x:2x2x1
jax: 0.10.0
libtpu: 0.0.40
codegen_flags: <defaults>
</compile_context>

<pallas_src>
import functools

import numpy as np

import jax
import jax.numpy as jnp
from jax.experimental import pallas as pl
from jax.experimental.pallas import tpu as pltpu

_MIN_NORM = 1e-15
_ATANH_CLAMP = 1e-7


# ------------------------------ fused kernel -------------------------------- #

def _fused_hconv_kernel(x_ref, w_ref, b_ref, s_ref, e_ref, o_ref, p_ref, *,
                        sqrt_c, k, cg_p, dilation, wp, m_pad):
    """Per (group, batch): logmap0 -> im2col -> ONE MXU dot -> +b -> expmap0.

    x_ref : (Cg_p, Lp_pad)        zero-padded input, flat row-major spatial axis
    w_ref : (Og_p, K*K*Cg_p)      logmapped weight, bf16
    b_ref : (Og_p, 1)             bias
    s_ref : (Hp, Lp_pad)          0/1 selector: input row h <-> flat lanes
    e_ref : (H_out, M_pad)        0/1 selector: kept output (row, col) lanes
    o_ref : (Og_p, M_pad)         dense conv grid (valid lanes cropped outside)
    p_ref : (K*K*Cg_p, M_pad)     bf16 im2col staging scratch
    """
    f32 = jnp.float32

    # ---- logmap0(x): one segmented reduction (MXU) + one broadcast (MXU) ----
    xr = x_ref[...]                                              # (Cg, Lp) f32
    seg = s_ref[...]                                             # (Hp, Lp) 0/1
    ssq = jax.lax.dot_general(xr * xr, seg, (((1,), (1,)), ((), ())),
                              preferred_element_type=f32)        # (Cg, Hp)
    nrm = jnp.maximum(jnp.sqrt(ssq), _MIN_NORM)
    y = jnp.clip(sqrt_c * nrm, -1.0 + _ATANH_CLAMP, 1.0 - _ATANH_CLAMP)
    artanh = 0.5 * jnp.log((1.0 + y) / (1.0 - y))
    lscale = jnp.dot(artanh / (sqrt_c * nrm), seg,
                     preferred_element_type=f32)                 # (Cg, Lp)
    xe = xr * lscale                                             # tangent space

    # ---- implicit im2col: K*K dense shifted-window copies, ONE deep dot -----
    # Output lane m = ho*Wp + wo holds the dense (stride-1, dilated) conv value
    # at (ho, wo); tap (kh, kw) is a contiguous shifted window of the flat xe.
    for kh in range(k):
        for kw in range(k):
            t = kh * k + kw
            d = dilation * (kh * wp + kw)
            p_ref[t * cg_p:(t + 1) * cg_p, :] = (
                xe[:, d:d + m_pad].astype(jnp.bfloat16))
    acc = jnp.dot(w_ref[...], p_ref[...], preferred_element_type=f32)
    acc = acc + b_ref[...]                                       # (Og, M_pad)

    # ---- expmap0: segmented norm over kept lanes, ONE dense store -----------
    sel = e_ref[...]                                             # (H_out, M_pad)
    osq = jax.lax.dot_general(acc * acc, sel, (((1,), (1,)), ((), ())),
                              preferred_element_type=f32)        # (Og, H_out)
    onrm = jnp.maximum(jnp.sqrt(osq), _MIN_NORM)
    escale = jnp.tanh(jnp.clip(sqrt_c * onrm, -15.0, 15.0)) / (sqrt_c * onrm)
    escale_flat = jnp.dot(escale, sel, preferred_element_type=f32)
    o_ref[...] = (acc * escale_flat).astype(o_ref.dtype)


# --------------------------------- wrapper ---------------------------------- #

def _round_up(v, m):
    return (v + m - 1) // m * m


def _logmap0_jnp(v, sqrt_c):
    nrm = jnp.maximum(jnp.linalg.norm(v, axis=-1, keepdims=True), _MIN_NORM)
    y = jnp.clip(sqrt_c * nrm, -1.0 + _ATANH_CLAMP, 1.0 - _ATANH_CLAMP)
    return v / nrm / sqrt_c * jnp.arctanh(y)


def _vmem_limit_bytes():
    # Per-generation limit (v7x: 64 MiB physical; v5e/v6e: 128 MiB).
    try:
        cap = pltpu.get_tpu_info().vmem_capacity_bytes
    except Exception:
        cap = 64 * 1024 * 1024
    return int(min(cap // 2, 64 * 1024 * 1024))


def fast_hyperbolic_conv2d(x, weight, bias, *, stride=1, padding=0,
                           dilation=1, groups=1, c=1.0):
    """Forward of FastHyperbolicConv2d.  x: (N, Cin, H, W); weight: OIHW."""
    nb, cin, h, w = x.shape
    o, cg, k, _ = weight.shape
    g = groups
    og = o // g
    sqrt_c = float(c) ** 0.5

    hp, wp = h + 2 * padding, w + 2 * padding
    ho1 = hp - dilation * (k - 1)                 # dense (stride-1) output rows
    wo1 = wp - dilation * (k - 1)                 # dense output cols
    h_out = (ho1 - 1) // stride + 1
    w_out = (wo1 - 1) // stride + 1
    m_flat = ho1 * wp                             # dense output lanes
    m_pad = _round_up(m_flat, 128)                # lane-dense output block
    d_max = dilation * ((k - 1) * wp + (k - 1))   # largest tap lane offset
    lp_pad = _round_up(m_pad + d_max, 128)        # flat input lanes (+tap tail)

    cg_p = _round_up(cg, 16)                      # bf16 sublane-tile alignment
    og_p = _round_up(og, 8)
    kkc = k * k * cg_p

    # Input: zero-pad spatially, flatten, pad channels/lanes.  Pads are zeros
    # and logmap0(0) == 0, so padding before logmap0 equals "logmap0 then pad".
    xf = x.astype(jnp.float32)
    xf = jnp.pad(xf, ((0, 0), (0, 0), (padding, padding), (padding, padding)))
    xf = xf.reshape(nb, g, cg, hp * wp)
    xf = jnp.pad(xf, ((0, 0), (0, 0), (0, cg_p - cg), (0, lp_pad - hp * wp)))

    # Weight: logmap0 (tiny, plain jnp), laid out (G, Og_p, K*K*Cg_p) bf16 so
    # the whole conv is one deep-contraction MXU matmul per block.
    w_e = _logmap0_jnp(weight.astype(jnp.float32), sqrt_c)
    w_e = w_e.reshape(g, og, cg, k, k).transpose(0, 1, 3, 4, 2)  # (G,Og,K,K,Cg)
    w_e = jnp.pad(w_e, ((0, 0), (0, og_p - og), (0, 0), (0, 0), (0, cg_p - cg)))
    w2 = w_e.reshape(g, og_p, kkc).astype(jnp.bfloat16)

    if bias is None:
        b_arr = jnp.zeros((g, og_p, 1), jnp.float32)
    else:
        b_arr = jnp.pad(bias.astype(jnp.float32).reshape(g, og),
                        ((0, 0), (0, og_p - og))).reshape(g, og_p, 1)

    # Constant 0/1 row-selector matrices (segmented norms / broadcasts via MXU).
    s_sel = np.zeros((hp, lp_pad), np.float32)
    for r in range(hp):
        s_sel[r, r * wp:r * wp + wp] = 1.0
    e_sel = np.zeros((h_out, m_pad), np.float32)
    for r in range(h_out):
        for cidx in range(w_out):
            e_sel[r, r * stride * wp + cidx * stride] = 1.0
    s_sel = jnp.asarray(s_sel)
    e_sel = jnp.asarray(e_sel)

    kernel = functools.partial(
        _fused_hconv_kernel, sqrt_c=sqrt_c, k=k, cg_p=cg_p,
        dilation=dilation, wp=wp, m_pad=m_pad)

    out_flat = pl.pallas_call(
        kernel,
        out_shape=jax.ShapeDtypeStruct((nb, g, og_p, m_pad), jnp.float32),
        grid=(g, nb),                  # batch innermost -> weight tile resident
        in_specs=[
            pl.BlockSpec((None, None, cg_p, lp_pad),
                         lambda gi, ni: (ni, gi, 0, 0)),
            pl.BlockSpec((None, og_p, kkc), lambda gi, ni: (gi, 0, 0)),
            pl.BlockSpec((None, og_p, 1), lambda gi, ni: (gi, 0, 0)),
            pl.BlockSpec((hp, lp_pad), lambda gi, ni: (0, 0)),
            pl.BlockSpec((h_out, m_pad), lambda gi, ni: (0, 0)),
        ],
        out_specs=pl.BlockSpec((None, None, og_p, m_pad),
                               lambda gi, ni: (ni, gi, 0, 0)),
        scratch_shapes=[pltpu.VMEM((kkc, m_pad), jnp.bfloat16)],
        compiler_params=pltpu.CompilerParams(
            dimension_semantics=("parallel", "parallel"),
            vmem_limit_bytes=_vmem_limit_bytes()),
    )(xf, w2, b_arr, s_sel, e_sel)

    # Crop valid channels / lanes, restore NCHW, apply the stride subsampling.
    out = out_flat[:, :, :og, :m_flat].reshape(nb, g * og, ho1, wp)
    out = out[:, :, 0:(h_out - 1) * stride + 1:stride,
              0:(w_out - 1) * stride + 1:stride]
    return out.astype(x.dtype)


# ----------------------------- pure-JAX reference --------------------------- #

def _ref_forward(x, weight, bias, *, stride, padding, dilation, groups, c):
    sqrt_c = jnp.sqrt(jnp.asarray(c, jnp.float32))

    def logmap0(v):
        nrm = jnp.maximum(jnp.linalg.norm(v, axis=-1, keepdims=True), _MIN_NORM)
        y = jnp.clip(sqrt_c * nrm, -1.0 + _ATANH_CLAMP, 1.0 - _ATANH_CLAMP)
        return v / nrm / sqrt_c * jnp.arctanh(y)

    def expmap0(u):
        nrm = jnp.maximum(jnp.linalg.norm(u, axis=-1, keepdims=True), _MIN_NORM)
        return jnp.tanh(jnp.clip(sqrt_c * nrm, -15.0, 15.0)) * u / (sqrt_c * nrm)

    xe, we = logmap0(x), logmap0(weight)
    ye = jax.lax.conv_general_dilated(
        xe, we, (stride, stride), [(padding, padding)] * 2,
        rhs_dilation=(dilation, dilation), feature_group_count=groups,
        dimension_numbers=("NCHW", "OIHW", "NCHW"))
    if bias is not None:
        ye = ye + bias.reshape(1, -1, 1, 1)
    return expmap0(ye)


# ------------------------------------ main ----------------------------------- #

if __name__ == "__main__":
    key = jax.random.PRNGKey(0)
    kx, kw = jax.random.split(key)

    # Module hyper-parameters (small, consistent with the PyTorch module).
    N, Cin, H, W = 2, 4, 16, 16
    Cout, K = 8, 3
    stride, padding, dilation, groups, c = 1, 1, 1, 1, 1.0

    # Deterministic params: xavier_uniform weight (O, Cin//g, K, K), zero bias.
    fan_in = (Cin // groups) * K * K
    fan_out = Cout * K * K
    bound = (6.0 / (fan_in + fan_out)) ** 0.5
    weight = jax.random.uniform(kw, (Cout, Cin // groups, K, K),
                                jnp.float32, -bound, bound)
    bias = jnp.zeros((Cout,), jnp.float32)

    # Input points on the Poincare ball (small norms over the last axis).
    x = jax.random.uniform(kx, (N, Cin, H, W), jnp.float32, -0.1, 0.1)

    out = fast_hyperbolic_conv2d(x, weight, bias, stride=stride,
                                 padding=padding, dilation=dilation,
                                 groups=groups, c=c)
    out = jax.block_until_ready(out)

    ref = _ref_forward(x, weight, bias, stride=stride, padding=padding,
                       dilation=dilation, groups=groups, c=c)
    assert out.shape == (N, Cout, H, W)
    # bf16 MXU operands -> relaxed tolerance (review's noted numerics change).
    assert jnp.allclose(out, ref, rtol=2e-2, atol=2e-3), "mismatch vs reference"

    print("KERNEL_OK")
</pallas_src>

<mosaic_0001>
module attributes {stable_mosaic.version = 11 : i64} {
  func.func @_fused_hconv_kernel(%arg0: i32, %arg1: i32, %arg2: memref<1x1x16x512xf32, #tpu.memory_space<vmem>>, %arg3: memref<1x8x144xbf16, #tpu.memory_space<vmem>>, %arg4: memref<1x8x1xf32, #tpu.memory_space<vmem>>, %arg5: memref<18x512xf32, #tpu.memory_space<vmem>>, %arg6: memref<16x384xf32, #tpu.memory_space<vmem>>, %arg7: memref<1x1x8x384xf32, #tpu.memory_space<vmem>>, %arg8: memref<144x384xbf16, #tpu.memory_space<vmem>>) attributes {dimension_semantics = [#tpu.dimension_semantics<parallel>, #tpu.dimension_semantics<parallel>], iteration_bounds = array<i64: 1, 2>, scalar_prefetch = 0 : i64, scratch_operands = 1 : i64, tpu.core_type = #tpu.core_type<tc>, window_params = [{transform_indices = @transform_0, window_bounds = array<i64: 1, 1, 16, 512>}, {transform_indices = @transform_1, window_bounds = array<i64: 1, 8, 144>}, {transform_indices = @transform_2, window_bounds = array<i64: 1, 8, 1>}, {pipeline_mode = #tpu.pipeline_mode<synchronous>, transform_indices = @transform_3, window_bounds = array<i64: 18, 512>}, {pipeline_mode = #tpu.pipeline_mode<synchronous>, transform_indices = @transform_4, window_bounds = array<i64: 16, 384>}, {transform_indices = @transform_5, window_bounds = array<i64: 1, 1, 8, 384>}]} {
    %c0 = arith.constant 0 : index
    %c0_0 = arith.constant 0 : index
    %c0_1 = arith.constant 0 : index
    %c0_2 = arith.constant 0 : index
    %0 = vector.load %arg2[%c0, %c0_0, %c0_1, %c0_2] : memref<1x1x16x512xf32, #tpu.memory_space<vmem>>, vector<1x1x16x512xf32>
    %1 = vector.shape_cast %0 : vector<1x1x16x512xf32> to vector<16x512xf32>
    %c0_3 = arith.constant 0 : index
    %c0_4 = arith.constant 0 : index
    %2 = vector.load %arg5[%c0_3, %c0_4] : memref<18x512xf32, #tpu.memory_space<vmem>>, vector<18x512xf32>
    %3 = arith.mulf %1, %1 : vector<16x512xf32>
    %cst = arith.constant dense<0.000000e+00> : vector<16x18xf32>
    %4 = tpu.matmul %3, %2, %cst {dimension_numbers = #tpu.dot_dimension_numbers<[1], [1], [0], [0], [0, 0, 1, 0], [], []>} : vector<16x512xf32>, vector<18x512xf32>, vector<16x18xf32> -> vector<16x18xf32>
    %5 = math.sqrt %4 : vector<16x18xf32>
    %cst_5 = arith.constant 1.000000e-15 : f32
    %6 = vector.broadcast %cst_5 : f32 to vector<16x18xf32>
    %7 = arith.maximumf %5, %6 : vector<16x18xf32>
    %cst_6 = arith.constant 1.000000e+00 : f32
    %8 = vector.broadcast %cst_6 : f32 to vector<16x18xf32>
    %9 = arith.mulf %8, %7 : vector<16x18xf32>
    %cst_7 = arith.constant -0.99999988 : f32
    %cst_8 = arith.constant 0.99999988 : f32
    %10 = vector.broadcast %cst_7 : f32 to vector<16x18xf32>
    %11 = arith.maximumf %10, %9 : vector<16x18xf32>
    %12 = vector.broadcast %cst_8 : f32 to vector<16x18xf32>
    %13 = arith.minimumf %12, %11 : vector<16x18xf32>
    %cst_9 = arith.constant 1.000000e+00 : f32
    %14 = vector.broadcast %cst_9 : f32 to vector<16x18xf32>
    %15 = arith.addf %14, %13 : vector<16x18xf32>
    %cst_10 = arith.constant 1.000000e+00 : f32
    %16 = vector.broadcast %cst_10 : f32 to vector<16x18xf32>
    %17 = arith.subf %16, %13 : vector<16x18xf32>
    %18 = arith.divf %15, %17 : vector<16x18xf32>
    %19 = math.log %18 : vector<16x18xf32>
    %cst_11 = arith.constant 5.000000e-01 : f32
    %20 = vector.broadcast %cst_11 : f32 to vector<16x18xf32>
    %21 = arith.mulf %20, %19 : vector<16x18xf32>
    %cst_12 = arith.constant 1.000000e+00 : f32
    %22 = vector.broadcast %cst_12 : f32 to vector<16x18xf32>
    %23 = arith.mulf %22, %7 : vector<16x18xf32>
    %24 = arith.divf %21, %23 : vector<16x18xf32>
    %cst_13 = arith.constant dense<0.000000e+00> : vector<16x512xf32>
    %25 = tpu.matmul %24, %2, %cst_13 {dimension_numbers = #tpu.dot_dimension_numbers<[1], [0], [0], [1], [0, 0, 1, 1], [], []>} : vector<16x18xf32>, vector<18x512xf32>, vector<16x512xf32> -> vector<16x512xf32>
    %26 = arith.mulf %1, %25 : vector<16x512xf32>
    %27 = vector.extract_strided_slice %26 {offsets = [0, 0], sizes = [16, 384], strides = [1, 1]} : vector<16x512xf32> to vector<16x384xf32>
    %28 = arith.truncf %27 : vector<16x384xf32> to vector<16x384xbf16>
    %c0_14 = arith.constant 0 : index
    %c0_15 = arith.constant 0 : index
    %29 = vector.load %arg8[%c0_14, %c0_15] : memref<144x384xbf16, #tpu.memory_space<vmem>>, vector<16x384xbf16>
    tpu.vector_store %arg8[%c0_14, %c0_15], %28 {strides = array<i32>} : memref<144x384xbf16, #tpu.memory_space<vmem>>, vector<16x384xbf16>,
    %30 = vector.extract_strided_slice %26 {offsets = [0, 1], sizes = [16, 384], strides = [1, 1]} : vector<16x512xf32> to vector<16x384xf32>
    %31 = arith.truncf %30 : vector<16x384xf32> to vector<16x384xbf16>
    %c16 = arith.constant 16 : index
    %c0_16 = arith.constant 0 : index
    %32 = vector.load %arg8[%c16, %c0_16] : memref<144x384xbf16, #tpu.memory_space<vmem>>, vector<16x384xbf16>
    tpu.vector_store %arg8[%c16, %c0_16], %31 {strides = array<i32>} : memref<144x384xbf16, #tpu.memory_space<vmem>>, vector<16x384xbf16>,
    %33 = vector.extract_strided_slice %26 {offsets = [0, 2], sizes = [16, 384], strides = [1, 1]} : vector<16x512xf32> to vector<16x384xf32>
    %34 = arith.truncf %33 : vector<16x384xf32> to vector<16x384xbf16>
    %c32 = arith.constant 32 : index
    %c0_17 = arith.constant 0 : index
    %35 = vector.load %arg8[%c32, %c0_17] : memref<144x384xbf16, #tpu.memory_space<vmem>>, vector<16x384xbf16>
    tpu.vector_store %arg8[%c32, %c0_17], %34 {strides = array<i32>} : memref<144x384xbf16, #tpu.memory_space<vmem>>, vector<16x384xbf16>,
    %36 = vector.extract_strided_slice %26 {offsets = [0, 18], sizes = [16, 384], strides = [1, 1]} : vector<16x512xf32> to vector<16x384xf32>
    %37 = arith.truncf %36 : vector<16x384xf32> to vector<16x384xbf16>
    %c48 = arith.constant 48 : index
    %c0_18 = arith.constant 0 : index
    %38 = vector.load %arg8[%c48, %c0_18] : memref<144x384xbf16, #tpu.memory_space<vmem>>, vector<16x384xbf16>
    tpu.vector_store %arg8[%c48, %c0_18], %37 {strides = array<i32>} : memref<144x384xbf16, #tpu.memory_space<vmem>>, vector<16x384xbf16>,
    %39 = vector.extract_strided_slice %26 {offsets = [0, 19], sizes = [16, 384], strides = [1, 1]} : vector<16x512xf32> to vector<16x384xf32>
    %40 = arith.truncf %39 : vector<16x384xf32> to vector<16x384xbf16>
    %c64 = arith.constant 64 : index
    %c0_19 = arith.constant 0 : index
    %41 = vector.load %arg8[%c64, %c0_19] : memref<144x384xbf16, #tpu.memory_space<vmem>>, vector<16x384xbf16>
    tpu.vector_store %arg8[%c64, %c0_19], %40 {strides = array<i32>} : memref<144x384xbf16, #tpu.memory_space<vmem>>, vector<16x384xbf16>,
    %42 = vector.extract_strided_slice %26 {offsets = [0, 20], sizes = [16, 384], strides = [1, 1]} : vector<16x512xf32> to vector<16x384xf32>
    %43 = arith.truncf %42 : vector<16x384xf32> to vector<16x384xbf16>
    %c80 = arith.constant 80 : index
    %c0_20 = arith.constant 0 : index
    %44 = vector.load %arg8[%c80, %c0_20] : memref<144x384xbf16, #tpu.memory_space<vmem>>, vector<16x384xbf16>
    tpu.vector_store %arg8[%c80, %c0_20], %43 {strides = array<i32>} : memref<144x384xbf16, #tpu.memory_space<vmem>>, vector<16x384xbf16>,
    %45 = vector.extract_strided_slice %26 {offsets = [0, 36], sizes = [16, 384], strides = [1, 1]} : vector<16x512xf32> to vector<16x384xf32>
    %46 = arith.truncf %45 : vector<16x384xf32> to vector<16x384xbf16>
    %c96 = arith.constant 96 : index
    %c0_21 = arith.constant 0 : index
    %47 = vector.load %arg8[%c96, %c0_21] : memref<144x384xbf16, #tpu.memory_space<vmem>>, vector<16x384xbf16>
    tpu.vector_store %arg8[%c96, %c0_21], %46 {strides = array<i32>} : memref<144x384xbf16, #tpu.memory_space<vmem>>, vector<16x384xbf16>,
    %48 = vector.extract_strided_slice %26 {offsets = [0, 37], sizes = [16, 384], strides = [1, 1]} : vector<16x512xf32> to vector<16x384xf32>
    %49 = arith.truncf %48 : vector<16x384xf32> to vector<16x384xbf16>
    %c112 = arith.constant 112 : index
    %c0_22 = arith.constant 0 : index
    %50 = vector.load %arg8[%c112, %c0_22] : memref<144x384xbf16, #tpu.memory_space<vmem>>, vector<16x384xbf16>
    tpu.vector_store %arg8[%c112, %c0_22], %49 {strides = array<i32>} : memref<144x384xbf16, #tpu.memory_space<vmem>>, vector<16x384xbf16>,
    %51 = vector.extract_strided_slice %26 {offsets = [0, 38], sizes = [16, 384], strides = [1, 1]} : vector<16x512xf32> to vector<16x384xf32>
    %52 = arith.truncf %51 : vector<16x384xf32> to vector<16x384xbf16>
    %c128 = arith.constant 128 : index
    %c0_23 = arith.constant 0 : index
    %53 = vector.load %arg8[%c128, %c0_23] : memref<144x384xbf16, #tpu.memory_space<vmem>>, vector<16x384xbf16>
    tpu.vector_store %arg8[%c128, %c0_23], %52 {strides = array<i32>} : memref<144x384xbf16, #tpu.memory_space<vmem>>, vector<16x384xbf16>,
    %c0_24 = arith.constant 0 : index
    %c0_25 = arith.constant 0 : index
    %c0_26 = arith.constant 0 : index
    %54 = vector.load %arg3[%c0_24, %c0_25, %c0_26] : memref<1x8x144xbf16, #tpu.memory_space<vmem>>, vector<1x8x144xbf16>
    %55 = vector.shape_cast %54 : vector<1x8x144xbf16> to vector<8x144xbf16>
    %c0_27 = arith.constant 0 : index
    %c0_28 = arith.constant 0 : index
    %56 = vector.load %arg8[%c0_27, %c0_28] : memref<144x384xbf16, #tpu.memory_space<vmem>>, vector<144x384xbf16>
    %cst_29 = arith.constant dense<0.000000e+00> : vector<8x384xf32>
    %57 = tpu.matmul %55, %56, %cst_29 {dimension_numbers = #tpu.dot_dimension_numbers<[1], [0], [0], [1], [0, 0, 1, 1], [], []>} : vector<8x144xbf16>, vector<144x384xbf16>, vector<8x384xf32> -> vector<8x384xf32>
    %c0_30 = arith.constant 0 : index
    %c0_31 = arith.constant 0 : index
    %c0_32 = arith.constant 0 : index
    %58 = vector.load %arg4[%c0_30, %c0_31, %c0_32] : memref<1x8x1xf32, #tpu.memory_space<vmem>>, vector<1x8x1xf32>
    %59 = vector.shape_cast %58 : vector<1x8x1xf32> to vector<8x1xf32>
    %60 = vector.broadcast %59 : vector<8x1xf32> to vector<8x384xf32>
    %61 = arith.addf %57, %60 : vector<8x384xf32>
    %c0_33 = arith.constant 0 : index
    %c0_34 = arith.constant 0 : index
    %62 = vector.load %arg6[%c0_33, %c0_34] : memref<16x384xf32, #tpu.memory_space<vmem>>, vector<16x384xf32>
    %63 = arith.mulf %61, %61 : vector<8x384xf32>
    %cst_35 = arith.constant dense<0.000000e+00> : vector<8x16xf32>
    %64 = tpu.matmul %63, %62, %cst_35 {dimension_numbers = #tpu.dot_dimension_numbers<[1], [1], [0], [0], [0, 0, 1, 0], [], []>} : vector<8x384xf32>, vector<16x384xf32>, vector<8x16xf32> -> vector<8x16xf32>
    %65 = math.sqrt %64 : vector<8x16xf32>
    %cst_36 = arith.constant 1.000000e-15 : f32
    %66 = vector.broadcast %cst_36 : f32 to vector<8x16xf32>
    %67 = arith.maximumf %65, %66 : vector<8x16xf32>
    %cst_37 = arith.constant 1.000000e+00 : f32
    %68 = vector.broadcast %cst_37 : f32 to vector<8x16xf32>
    %69 = arith.mulf %68, %67 : vector<8x16xf32>
    %cst_38 = arith.constant -1.500000e+01 : f32
    %cst_39 = arith.constant 1.500000e+01 : f32
    %70 = vector.broadcast %cst_38 : f32 to vector<8x16xf32>
    %71 = arith.maximumf %70, %69 : vector<8x16xf32>
    %72 = vector.broadcast %cst_39 : f32 to vector<8x16xf32>
    %73 = arith.minimumf %72, %71 : vector<8x16xf32>
    %74 = math.tanh %73 : vector<8x16xf32>
    %cst_40 = arith.constant 1.000000e+00 : f32
    %75 = vector.broadcast %cst_40 : f32 to vector<8x16xf32>
    %76 = arith.mulf %75, %67 : vector<8x16xf32>
    %77 = arith.divf %74, %76 : vector<8x16xf32>
    %cst_41 = arith.constant dense<0.000000e+00> : vector<8x384xf32>
    %78 = tpu.matmul %77, %62, %cst_41 {dimension_numbers = #tpu.dot_dimension_numbers<[1], [0], [0], [1], [0, 0, 1, 1], [], []>} : vector<8x16xf32>, vector<16x384xf32>, vector<8x384xf32> -> vector<8x384xf32>
    %79 = arith.mulf %61, %78 : vector<8x384xf32>
    %c0_42 = arith.constant 0 : index
    %c0_43 = arith.constant 0 : index
    %c0_44 = arith.constant 0 : index
    %c0_45 = arith.constant 0 : index
    %80 = vector.load %arg7[%c0_42, %c0_43, %c0_44, %c0_45] : memref<1x1x8x384xf32, #tpu.memory_space<vmem>>, vector<1x1x8x384xf32>
    %81 = vector.shape_cast %80 : vector<1x1x8x384xf32> to vector<8x384xf32>
    %82 = vector.shape_cast %79 : vector<8x384xf32> to vector<1x1x8x384xf32>
    tpu.vector_store %arg7[%c0_42, %c0_43, %c0_44, %c0_45], %82 {strides = array<i32>} : memref<1x1x8x384xf32, #tpu.memory_space<vmem>>, vector<1x1x8x384xf32>,
    return
  }
  func.func @transform_0(%arg0: i32, %arg1: i32) -> (i32, i32, i32, i32) {
    %c0_i32 = arith.constant 0 : i32
    %c0_i32_0 = arith.constant 0 : i32
    %c0_i32_1 = arith.constant 0 : i32
    return %arg1, %arg0, %c0_i32, %c0_i32_0 : i32, i32, i32, i32
  }
  func.func @transform_1(%arg0: i32, %arg1: i32) -> (i32, i32, i32) {
    %c0_i32 = arith.constant 0 : i32
    %c0_i32_0 = arith.constant 0 : i32
    %c0_i32_1 = arith.constant 0 : i32
    return %arg0, %c0_i32, %c0_i32_0 : i32, i32, i32
  }
  func.func @transform_2(%arg0: i32, %arg1: i32) -> (i32, i32, i32) {
    %c0_i32 = arith.constant 0 : i32
    %c0_i32_0 = arith.constant 0 : i32
    %c0_i32_1 = arith.constant 0 : i32
    return %arg0, %c0_i32, %c0_i32_0 : i32, i32, i32
  }
  func.func @transform_3(%arg0: i32, %arg1: i32) -> (i32, i32) {
    %c0_i32 = arith.constant 0 : i32
    %c0_i32_0 = arith.constant 0 : i32
    %c0_i32_1 = arith.constant 0 : i32
    return %c0_i32, %c0_i32_0 : i32, i32
  }
  func.func @transform_4(%arg0: i32, %arg1: i32) -> (i32, i32) {
    %c0_i32 = arith.constant 0 : i32
    %c0_i32_0 = arith.constant 0 : i32
    %c0_i32_1 = arith.constant 0 : i32
    return %c0_i32, %c0_i32_0 : i32, i32
  }
  func.func @transform_5(%arg0: i32, %arg1: i32) -> (i32, i32, i32, i32) {
    %c0_i32 = arith.constant 0 : i32
    %c0_i32_0 = arith.constant 0 : i32
    %c0_i32_1 = arith.constant 0 : i32
    return %arg1, %arg0, %c0_i32, %c0_i32_0 : i32, i32, i32, i32
  }
}

</mosaic_0001>

<llo_original>
// kernel: tpu_custom_call.1
$region0: #{tpu_custom_call.1}
  #allocation0 [shape = 'u32[]', space=smem, size = 0x4, offset = 0x4, fixed_abs, tag = 'smem constant byte address 0x4 - core index']
  #allocation1 [shape = 'u32[144,128]{1,0:T(1,128)}', space=vmem, size = 0x12000, scoped, tag = 'internal scratch']
  #allocation2 [shape = 'bf16[144,384]{1,0:T(16,128)(2,1)}', space=vmem, size = 0x1b000, scoped, tag = 'scratch operand']
  %s0 = inlined_call_operand.hbm [shape: f32[2,1,16,512], index: 0, kind: input, shape index: {}]
  %s1 = inlined_call_operand.vmem [shape: bf16[1,8,144], index: 1, kind: input, shape index: {}]
  %s2 = inlined_call_operand.vmem [shape: f32[1,8,1], index: 2, kind: input, shape index: {}]
  %s3 = inlined_call_operand.hbm [shape: f32[18,512], index: 3, kind: input, shape index: {}]
  %s4 = inlined_call_operand.hbm [shape: f32[16,384], index: 4, kind: input, shape index: {}]
  %s5 = inlined_call_operand.hbm [shape: f32[2,1,8,384], index: 5, kind: output, shape index: {}]
  %s6 = sld [smem:[#allocation0]]
  $region65: #{tpu_custom_call.1} parent=0
    _
  %s8 = ssub.s32 1, %s6
  %s9 = scalar_select 0, %s8, %s6
  $region1: #{tpu_custom_call.1} parent=0
    #allocation3 [shape = 'u8[65536]{0}', space=vmem, size = 0x10000, scoped, tag = 'input window, operand 0']
    #allocation4 [shape = 's32[2]{0}', space=sflag, size = 0x8, scoped, tag = 'scoped memory for tpu_custom_call.1']
    #allocation5 [shape = 's32[2]{0}', space=sflag, size = 0x8, scoped, tag = 'scoped memory for tpu_custom_call.1']
    #allocation6 [shape = 'u8[49152]{0}', space=vmem, size = 0xc000, scoped, tag = 'input window, operand 3, single buffered']
    #allocation7 [shape = 's32[1]{0}', space=sflag, size = 0x4, scoped, tag = 'scoped memory for tpu_custom_call.1']
    #allocation8 [shape = 'u8[24576]{0}', space=vmem, size = 0x6000, scoped, tag = 'input window, operand 4, single buffered']
    #allocation9 [shape = 'u8[24576]{0}', space=vmem, size = 0x6000, scoped, tag = 'output window, operand 0']
    %10 = vsyncpa [#allocation4], 0
    %s11 = scalar_lea.sflag [#allocation4], 1
    %12 = vsyncpa %s11, 0
    %13 = vsyncpa [#allocation7], 0
    %14 = vsyncpa [#allocation5], 0
    %s15 = scalar_lea.sflag [#allocation5], 1
    %16 = vsyncpa %s15, 0
    loop: start=0, step=1, limit=4
    $region2: #{tpu_custom_call.1} parent=1 // loop_pre_header
      _
    $region3: #{tpu_custom_call.1} parent=1 // loop_header
      %s18 = sphi 0, %s22
      %p19 = scmp.ge.s32.totalorder %s18, 4
      %s25 = sphi 0, %s37
      %s26 = sphi 0, %s33
      %s27 = sphi 0, %s25
      %s28 = sphi 0, %s26
      %s29 = sphi 0, %s27
      %s30 = sphi 0, %s28
      %s42 = sphi 0, %s44
      %s45 = sphi 0, %s42
      %s46 = sphi 0, %s45
      %s62 = sphi 0, %s46
      %s68 = sphi 0, %s70
      %s71 = sphi 0, %s68
      %s72 = sphi 0, %s71
      %s88 = sphi 0, %s72
      %s94 = sphi 0, %s96
      %s97 = sphi 0, %s94
      %s98 = sphi 0, %s97
      %s114 = sphi 0, %s98
      %s118 = sphi 0, %s118
      %s120 = sphi 0, %s118
      %s121 = sphi 0, %s120
      %s135 = sphi 0, %s121
      %s139 = sphi 0, %s139
      %s141 = sphi 0, %s139
      %s142 = sphi 0, %s141
      %s156 = sphi 0, %s142
      %s164 = sphi 0, %s166
      %s167 = sphi 0, %s164
      %s168 = sphi 0, %s167
      %s184 = sphi 0, %s168
    $region4: #{tpu_custom_call.1} parent=1 // loop_header_branch
      %21 = sbr.rel (%p19) target = $region8
    $region5: #{tpu_custom_call.1} parent=1 // loop_body
      %s23 = ssub.s32 %s18, 1
      %s24 = ssub.s32 %s18, 2
      %s31 = sadd.s32 1, %s26
      %p32 = scmp.ge.s32.totalorder %s31, 2
      %s33 = scalar_select %p32, 0, %s31
      %s34 = sadd.s32 1, %s25
      %s35 = scalar_select %p32, %s34, %s25
      %p36 = scmp.ge.s32.totalorder %s35, 1
      %s37 = scalar_select %p36, 0, %s35
      %s38 = ssub.s32 %s26, %s33
      %s39 = ssub.s32 %s25, %s37
      %s40 = sor.u32 %s38, %s39
      %p41 = scmp.eq.s32.totalorder %s40, 0
      %s43 = sadd.s32 %s42, 1
      %s44 = scalar_select %p41, %s42, %s43
      %p47 = pneg %p41
      %p48 = scmp.eq.s32.totalorder %s18, 1
      %p49 = por %p47, %p48
      %p50 = scmp.ne.s32.totalorder %s42, %s45
      %p51 = scmp.eq.s32.totalorder %s18, 0
      %p52 = por %p50, %p51
      %p53 = scmp.ne.s32.totalorder %s42, %s45
      %p54 = scmp.eq.s32.totalorder %s23, 1
      %p55 = por %p53, %p54
      %p56 = scmp.ne.s32.totalorder %s45, %s46
      %p57 = scmp.eq.s32.totalorder %s23, 0
      %p58 = por %p56, %p57
      %p59 = scmp.ne.s32.totalorder %s45, %s46
      %p60 = scmp.eq.s32.totalorder %s24, 1
      %p61 = por %p59, %p60
      %p63 = scmp.ne.s32.totalorder %s46, %s62
      %p64 = scmp.eq.s32.totalorder %s24, 0
      %p65 = por %p63, %p64
      %s66 = ssub.s32 %s25, %s37
      %p67 = scmp.eq.s32.totalorder %s66, 0
      %s69 = sadd.s32 %s68, 1
      %s70 = scalar_select %p67, %s68, %s69
      %p73 = pneg %p67
      %p74 = scmp.eq.s32.totalorder %s18, 1
      %p75 = por %p73, %p74
      %p76 = scmp.ne.s32.totalorder %s68, %s71
      %p77 = scmp.eq.s32.totalorder %s18, 0
      %p78 = por %p76, %p77
      %p79 = scmp.ne.s32.totalorder %s68, %s71
      %p80 = scmp.eq.s32.totalorder %s23, 1
      %p81 = por %p79, %p80
      %p82 = scmp.ne.s32.totalorder %s71, %s72
      %p83 = scmp.eq.s32.totalorder %s23, 0
      %p84 = por %p82, %p83
      %p85 = scmp.ne.s32.totalorder %s71, %s72
      %p86 = scmp.eq.s32.totalorder %s24, 1
      %p87 = por %p85, %p86
      %p89 = scmp.ne.s32.totalorder %s72, %s88
      %p90 = scmp.eq.s32.totalorder %s24, 0
      %p91 = por %p89, %p90
      %s92 = ssub.s32 %s25, %s37
      %p93 = scmp.eq.s32.totalorder %s92, 0
      %s95 = sadd.s32 %s94, 1
      %s96 = scalar_select %p93, %s94, %s95
      %p99 = pneg %p93
      %p100 = scmp.eq.s32.totalorder %s18, 1
      %p101 = por %p99, %p100
      %p102 = scmp.ne.s32.totalorder %s94, %s97
      %p103 = scmp.eq.s32.totalorder %s18, 0
      %p104 = por %p102, %p103
      %p105 = scmp.ne.s32.totalorder %s94, %s97
      %p106 = scmp.eq.s32.totalorder %s23, 1
      %p107 = por %p105, %p106
      %p108 = scmp.ne.s32.totalorder %s97, %s98
      %p109 = scmp.eq.s32.totalorder %s23, 0
      %p110 = por %p108, %p109
      %p111 = scmp.ne.s32.totalorder %s97, %s98
      %p112 = scmp.eq.s32.totalorder %s24, 1
      %p113 = por %p111, %p112
      %p115 = scmp.ne.s32.totalorder %s98, %s114
      %p116 = scmp.eq.s32.totalorder %s24, 0
      %p117 = por %p115, %p116
      %s119 = sadd.s32 %s118, 1
      %p122 = scmp.eq.s32.totalorder %s18, 1
      %p123 = scmp.ne.s32.totalorder %s118, %s120
      %p124 = scmp.eq.s32.totalorder %s18, 0
      %p125 = por %p123, %p124
      %p126 = scmp.ne.s32.totalorder %s118, %s120
      %p127 = scmp.eq.s32.totalorder %s23, 1
      %p128 = por %p126, %p127
      %p129 = scmp.ne.s32.totalorder %s120, %s121
      %p130 = scmp.eq.s32.totalorder %s23, 0
      %p131 = por %p129, %p130
      %p132 = scmp.ne.s32.totalorder %s120, %s121
      %p133 = scmp.eq.s32.totalorder %s24, 1
      %p134 = por %p132, %p133
      %p136 = scmp.ne.s32.totalorder %s121, %s135
      %p137 = scmp.eq.s32.totalorder %s24, 0
      %p138 = por %p136, %p137
      %s140 = sadd.s32 %s139, 1
      %p143 = scmp.eq.s32.totalorder %s18, 1
      %p144 = scmp.ne.s32.totalorder %s139, %s141
      %p145 = scmp.eq.s32.totalorder %s18, 0
      %p146 = por %p144, %p145
      %p147 = scmp.ne.s32.totalorder %s139, %s141
      %p148 = scmp.eq.s32.totalorder %s23, 1
      %p149 = por %p147, %p148
      %p150 = scmp.ne.s32.totalorder %s141, %s142
      %p151 = scmp.eq.s32.totalorder %s23, 0
      %p152 = por %p150, %p151
      %p153 = scmp.ne.s32.totalorder %s141, %s142
      %p154 = scmp.eq.s32.totalorder %s24, 1
      %p155 = por %p153, %p154
      %p157 = scmp.ne.s32.totalorder %s142, %s156
      %p158 = scmp.eq.s32.totalorder %s24, 0
      %p159 = por %p157, %p158
      %s160 = ssub.s32 %s26, %s33
      %s161 = ssub.s32 %s25, %s37
      %s162 = sor.u32 %s160, %s161
      %p163 = scmp.eq.s32.totalorder %s162, 0
      %s165 = sadd.s32 %s164, 1
      %s166 = scalar_select %p163, %s164, %s165
      %p169 = pneg %p163
      %p170 = scmp.eq.s32.totalorder %s18, 1
      %p171 = por %p169, %p170
      %p172 = scmp.ne.s32.totalorder %s164, %s167
      %p173 = scmp.eq.s32.totalorder %s18, 0
      %p174 = por %p172, %p173
      %p175 = scmp.ne.s32.totalorder %s164, %s167
      %p176 = scmp.eq.s32.totalorder %s23, 1
      %p177 = por %p175, %p176
      %p178 = scmp.ne.s32.totalorder %s167, %s168
      %p179 = scmp.eq.s32.totalorder %s23, 0
      %p180 = por %p178, %p179
      %p181 = scmp.ne.s32.totalorder %s167, %s168
      %p182 = scmp.eq.s32.totalorder %s24, 1
      %p183 = por %p181, %p182
      %p185 = scmp.ne.s32.totalorder %s168, %s184
      %p186 = scmp.eq.s32.totalorder %s24, 0
      %p187 = por %p185, %p186
      %p188 = scmp.le.s32.totalorder 1, %s18
      %p189 = scmp.lt.s32.totalorder %s18, 3
      %p190 = pnand %p188, %p189
      %p191 = pneg %p190
      // Predicated region
      $region9: #{tpu_custom_call.1} parent=5 // pred_check
        _
      $region10: #{tpu_custom_call.1} parent=5 // pred_check_branch
        %193 = sbr.rel (%p190) target = $region12
      $region11: #{tpu_custom_call.1} parent=5 // pred_region
        %s194 = ssub.s32 %s18, 1
        // Predicated region
        $region13: #{tpu_custom_call.1} parent=11 // pred_check
          %p195 = pneg %p84
        $region14: #{tpu_custom_call.1} parent=11 // pred_check_branch
          %197 = sbr.rel (%p195) target = $region16
        $region15: #{tpu_custom_call.1} parent=11 // pred_region
          %p198 = scmp.lt.s32.totalorder %s27, 0
          %s199 = scalar_select %p198, %s27, 0
          %s200 = smul.addr %s199, 2
          %s201 = smul.addr %s200, 4
          %s202 = scalar_lea.vmem %s1, %s201
        $region16: #{tpu_custom_call.1} parent=11 // pred_fallthru
          _
        // Predicated region
        $region17: #{tpu_custom_call.1} parent=11 // pred_check
          %p203 = pneg %p110
        $region18: #{tpu_custom_call.1} parent=11 // pred_check_branch
          %205 = sbr.rel (%p203) target = $region20
        $region19: #{tpu_custom_call.1} parent=11 // pred_region
          %p206 = scmp.lt.s32.totalorder %s27, 0
          %s207 = scalar_select %p206, %s27, 0
          %s208 = smul.addr %s207, 8
          %s209 = scalar_lea.vmem %s2, %s208
        $region20: #{tpu_custom_call.1} parent=11 // pred_fallthru
          _
        // Predicated region
        $region21: #{tpu_custom_call.1} parent=11 // pred_check
          %p210 = pneg %p131
        $region22: #{tpu_custom_call.1} parent=11 // pred_check_branch
          %212 = sbr.rel (%p210) target = $region24
        $region23: #{tpu_custom_call.1} parent=11 // pred_region
          %s214 = ssub.s32 1536, 1536
          %215 = vsyncadd [#allocation7], %s214
          %s216 = sshll.u32 [#allocation6], 4
          %s217 = int_to_ptr.vmem [resolvable:$true] %s216
          %222 = dma.hbm_to_vmem [thread:$0]  %s3, 1536, %s217, [#allocation7], 512, 512, 32
        $region24: #{tpu_custom_call.1} parent=11 // pred_fallthru
          _
        // Predicated region
        $region25: #{tpu_custom_call.1} parent=11 // pred_check
          %p223 = pneg %p152
        $region26: #{tpu_custom_call.1} parent=11 // pred_check_branch
          %225 = sbr.rel (%p223) target = $region28
        $region27: #{tpu_custom_call.1} parent=11 // pred_region
          %s227 = ssub.s32 768, 768
          %228 = vsyncadd [#allocation7], %s227
          %s229 = sshll.u32 [#allocation8], 4
          %s230 = int_to_ptr.vmem [resolvable:$true] %s229
          %235 = dma.hbm_to_vmem [thread:$0]  %s4, 768, %s230, [#allocation7], 384, 384, 24
        $region28: #{tpu_custom_call.1} parent=11 // pred_fallthru
          _
      $region12: #{tpu_custom_call.1} parent=5 // pred_fallthru
        _
      %p236 = scmp.lt.s32.totalorder %s18, 2
      // Predicated region
      $region29: #{tpu_custom_call.1} parent=5 // pred_check
        %p237 = pneg %p236
      $region30: #{tpu_custom_call.1} parent=5 // pred_check_branch
        %239 = sbr.rel (%p237) target = $region32
      $region31: #{tpu_custom_call.1} parent=5 // pred_region
        // Predicated region
        $region33: #{tpu_custom_call.1} parent=31 // pred_check
          %p240 = pneg %p52
        $region34: #{tpu_custom_call.1} parent=31 // pred_check_branch
          %242 = sbr.rel (%p240) target = $region36
        $region35: #{tpu_custom_call.1} parent=31 // pred_region
          %s243 = sand.u32 %s42, 1
          %s244 = scalar_lea.sflag [#allocation4], %s243
          %s245 = sand.u32 %s42, 1
          %s246 = smul.addr %s245, 64
          %s247 = scalar_lea.vmem [#allocation3], %s246
          %s249 = ssub.s32 1024, 1024
          %250 = vsyncadd %s244, %s249
          %s251 = smul.addr %s25, 8
          %s252 = smul.addr %s26, 8
          %s253 = sadd.s32 %s251, %s252
          %s254 = smul.addr %s253, 128
          %s255 = scalar_lea.hbm %s0, %s254
          %s256 = sshll.u32 %s247, 4
          %s257 = int_to_ptr.vmem [resolvable:$true] %s256
          %262 = dma.hbm_to_vmem [thread:$0]  %s255, 1024, %s257, %s244, 512, 512, 32
        $region36: #{tpu_custom_call.1} parent=31 // pred_fallthru
          _
      $region32: #{tpu_custom_call.1} parent=5 // pred_fallthru
        _
      %p263 = scmp.le.s32.totalorder 1, %s18
      %p264 = scmp.lt.s32.totalorder %s18, 3
      %p265 = pnand %p263, %p264
      %p266 = pneg %p265
      // Predicated region
      $region37: #{tpu_custom_call.1} parent=5 // pred_check
        _
      $region38: #{tpu_custom_call.1} parent=5 // pred_check_branch
        %268 = sbr.rel (%p265) target = $region40
      $region39: #{tpu_custom_call.1} parent=5 // pred_region
        %s269 = ssub.s32 %s18, 1
        %s270 = sand.u32 %s45, 1
        %s271 = scalar_lea.sflag [#allocation4], %s270
        %s272 = sand.u32 %s45, 1
        %s273 = smul.addr %s272, 64
        %s274 = scalar_lea.vmem [#allocation3], %s273
        // Predicated region
        $region41: #{tpu_custom_call.1} parent=39 // pred_check
          %p275 = pneg %p58
        $region42: #{tpu_custom_call.1} parent=39 // pred_check_branch
          %277 = sbr.rel (%p275) target = $region44
        $region43: #{tpu_custom_call.1} parent=39 // pred_region
          %278 = dma.done %s271, 1024
        $region44: #{tpu_custom_call.1} parent=39 // pred_fallthru
          _
        // Predicated region
        $region45: #{tpu_custom_call.1} parent=39 // pred_check
          %p279 = pneg %p131
        $region46: #{tpu_custom_call.1} parent=39 // pred_check_branch
          %281 = sbr.rel (%p279) target = $region48
        $region47: #{tpu_custom_call.1} parent=39 // pred_region
          %282 = dma.done [#allocation7], 1536
        $region48: #{tpu_custom_call.1} parent=39 // pred_fallthru
          _
        // Predicated region
        $region49: #{tpu_custom_call.1} parent=39 // pred_check
          %p283 = pneg %p152
        $region50: #{tpu_custom_call.1} parent=39 // pred_check_branch
          %285 = sbr.rel (%p283) target = $region52
        $region51: #{tpu_custom_call.1} parent=39 // pred_region
          %286 = dma.done [#allocation7], 768
        $region52: #{tpu_custom_call.1} parent=39 // pred_fallthru
          _
        %s287 = sand.u32 %s45, 1
        %s288 = scalar_lea.sflag [#allocation4], %s287
        %s289 = sand.u32 %s45, 1
        %s290 = smul.addr %s289, 64
        %s291 = scalar_lea.vmem [#allocation3], %s290
        %p292 = pneg %p58
        %p293 = pneg %p55
        %p294 = scmp.lt.s32.totalorder %s27, 0
        %s295 = scalar_select %p294, %s27, 0
        %s296 = smul.addr %s295, 2
        %s297 = smul.addr %s296, 4
        %s298 = scalar_lea.vmem %s1, %s297
        %p299 = pneg %p84
        %p300 = pneg %p81
        %p301 = scmp.lt.s32.totalorder %s27, 0
        %s302 = scalar_select %p301, %s27, 0
        %s303 = smul.addr %s302, 8
        %s304 = scalar_lea.vmem %s2, %s303
        %p305 = pneg %p110
        %p306 = pneg %p107
        %p307 = pneg %p131
        %p308 = pneg %p128
        %p309 = pneg %p152
        %p310 = pneg %p149
        %p311 = pneg %p180
        %p312 = pneg %p177
        %s313 = sand.u32 %s167, 1
        %s314 = scalar_lea.sflag [#allocation5], %s313
        %s315 = sand.u32 %s167, 1
        %s316 = smul.addr %s315, 24
        %s317 = scalar_lea.vmem [#allocation9], %s316
        %p318 = scmp.lt.s32.totalorder %s27, 0
        %s319 = scalar_select %p318, %s27, 0
        %s320 = smul.addr %s319, 2
        %s321 = smul.addr %s320, 4
        %s322 = scalar_lea.vmem %s1, %s321
        %p323 = scmp.lt.s32.totalorder %s27, 0
        %s324 = scalar_select %p323, %s27, 0
        %s325 = smul.addr %s324, 8
        %s326 = scalar_lea.vmem %s2, %s325
        %v328 = vld [vmem:[%s274] sm:$0xff]
        %v329 = vld [vmem:[%s274 + $0x8] sm:$0xff]
        %v330 = vld [vmem:[%s274 + $0x10] sm:$0xff]
        %v331 = vld [vmem:[%s274 + $0x18] sm:$0xff]
        %v332 = vld [vmem:[%s274 + $0x20] sm:$0xff]
        %v333 = vld [vmem:[%s274 + $0x28] sm:$0xff]
        %v334 = vld [vmem:[%s274 + $0x30] sm:$0xff]
        %v335 = vld [vmem:[%s274 + $0x38] sm:$0xff]
        %v336 = vld [vmem:[#allocation6] sm:$0xff]
        %v337 = vld [vmem:[#allocation6 + $0x8] sm:$0xff]
        %v338 = vld [vmem:[#allocation6 + $0x10] sm:$0xff]
        %v339 = vld [vmem:[#allocation6 + $0x18] sm:$0xff]
        %v340 = vld [vmem:[#allocation6 + $0x20] sm:$0xff]
        %v341 = vld [vmem:[#allocation6 + $0x28] sm:$0xff]
        %v342 = vld [vmem:[#allocation6 + $0x30] sm:$0xff]
        %v343 = vld [vmem:[#allocation6 + $0x38] sm:$0xff]
        %v344 = vld [vmem:[#allocation6 + $0x40] sm:$0x3]
        %v345 = vld [vmem:[#allocation6 + $0x48] sm:$0x3]
        %v346 = vld [vmem:[#allocation6 + $0x50] sm:$0x3]
        %v347 = vld [vmem:[#allocation6 + $0x58] sm:$0x3]
        %v348 = vmul.f32 %v328, %v328
        %v349 = vmul.f32 %v329, %v329
        %v350 = vmul.f32 %v330, %v330
        %v351 = vmul.f32 %v331, %v331
        %v352 = vmul.f32 %v332, %v332
        %v353 = vmul.f32 %v333, %v333
        %v354 = vmul.f32 %v334, %v334
        %v355 = vmul.f32 %v335, %v335
        %356 = vmatprep.subr.mxu0 %v337
        %357 = vmatpush1.xpose.msra.mxu0 %v336
        %358 = vmatprep.subr.mxu0 %v341
        %359 = vmatpush1.xpose.msra.mxu0 %v340
        %360 = vmatprep.subr.mxu0 %v345
        %361 = vmatpush1.xpose.msra.mxu0 %v344
        %362 = vmatprep.subr.mxu0 0.0
        %363 = vmatpush1.xpose.msra.mxu0 0.0
        %364 = vmatprep.subr.mxu0 0.0
        %365 = vmatpush1.xpose.msra.mxu0 0.0
        %366 = vmatprep.subr.mxu0 0.0
        %367 = vmatpush1.xpose.msra.mxu0 0.0
        %368 = vmatprep.subr.mxu0 0.0
        %369 = vmatpush1.xpose.msra.mxu0 0.0
        %370 = vmatprep.subr.mxu0 0.0
        %371 = vmatpush1.xpose.msra.mxu0 0.0
        %372 = vmatprep.subr.mxu0 0.0
        %373 = vmatpush1.xpose.msra.mxu0 0.0
        %374 = vmatprep.subr.mxu0 0.0
        %375 = vmatpush1.xpose.msra.mxu0 0.0
        %376 = vmatprep.subr.mxu0 0.0
        %377 = vmatpush1.xpose.msra.mxu0 0.0
        %378 = vmatprep.subr.mxu0 0.0
        %379 = vmatpush1.xpose.msra.mxu0 0.0
        %380 = vmatprep.subr.mxu0 0.0
        %381 = vmatpush1.xpose.msra.mxu0 0.0
        %382 = vmatprep.subr.mxu0 0.0
        %383 = vmatpush1.xpose.msra.mxu0 0.0
        %384 = vmatprep.subr.mxu0 0.0
        %385 = vmatpush1.xpose.msra.mxu0 0.0
        %386 = vmatprep.subr.mxu0 0.0
        %387 = vmatpush1.xpose.msra.mxu0 0.0
        %388 = vmatprep.subr.mxu0 0.0
        %389 = vmatpush1.xpose.msra.mxu0 0.0
        %390 = vmatprep.subr.mxu0 0.0
        %391 = vmatpush1.xpose.msra.mxu0 0.0
        %392 = vmatprep.subr.mxu0 0.0
        %393 = vmatpush1.xpose.msra.mxu0 0.0
        %394 = vmatprep.subr.mxu0 0.0
        %395 = vmatpush1.xpose.msra.mxu0 0.0
        %396 = vmatprep.subr.mxu0 0.0
        %397 = vmatpush1.xpose.msra.mxu0 0.0
        %398 = vmatprep.subr.mxu0 0.0
        %399 = vmatpush1.xpose.msra.mxu0 0.0
        %400 = vmatprep.subr.mxu0 0.0
        %401 = vmatpush1.xpose.msra.mxu0 0.0
        %402 = vmatprep.subr.mxu0 0.0
        %403 = vmatpush1.xpose.msra.mxu0 0.0
        %404 = vmatprep.subr.mxu0 0.0
        %405 = vmatpush1.xpose.msra.mxu0 0.0
        %406 = vmatprep.subr.mxu0 0.0
        %407 = vmatpush1.xpose.msra.mxu0 0.0
        %408 = vmatprep.subr.mxu0 0.0
        %409 = vmatpush1.xpose.msra.mxu0 0.0
        %410 = vmatprep.subr.mxu0 0.0
        %411 = vmatpush1.xpose.msra.mxu0 0.0
        %412 = vmatprep.subr.mxu0 0.0
        %413 = vmatpush1.xpose.msra.mxu0 0.0
        %414 = vmatprep.subr.mxu0 0.0
        %415 = vmatpush1.xpose.msra.mxu0 0.0
        %416 = vmatprep.subr.mxu0 0.0
        %417 = vmatpush1.xpose.msra.mxu0 0.0
        %418 = vmatprep.subr.mxu0 0.0
        %419 = vmatpush1.xpose.msra.mxu0 0.0
        %420 = vmatprep.mubr.f32.mxu0 %v349
        %421 = vmatmul.mubr.f32.gmra.mrb[0].mxu0 %v348
        %v422 = vpop.f32.mrb[0].mxu0
        %v423 = vadd.f32 0.0, %v422
        %v424 = vpop.f32.mrb[0].mxu0
        %425 = vmatprep.mubr.f32.mxu0 %v353
        %426 = vmatmul.mubr.f32.gmra.mrb[0].mxu0 %v352
        %v427 = vpop.f32.mrb[0].mxu0
        %v428 = vadd.f32 0.0, %v427
        %v429 = vpop.f32.mrb[0].mxu0
        %430 = vdwg.mxu0
        %431 = vmatprep.subr.mxu0 %v339
        %432 = vmatpush1.xpose.msra.mxu0 %v338
        %433 = vmatprep.subr.mxu0 %v343
        %434 = vmatpush1.xpose.msra.mxu0 %v342
        %435 = vmatprep.subr.mxu0 %v347
        %436 = vmatpush1.xpose.msra.mxu0 %v346
        %437 = vmatprep.subr.mxu0 0.0
        %438 = vmatpush1.xpose.msra.mxu0 0.0
        %439 = vmatprep.subr.mxu0 0.0
        %440 = vmatpush1.xpose.msra.mxu0 0.0
        %441 = vmatprep.subr.mxu0 0.0
        %442 = vmatpush1.xpose.msra.mxu0 0.0
        %443 = vmatprep.subr.mxu0 0.0
        %444 = vmatpush1.xpose.msra.mxu0 0.0
        %445 = vmatprep.subr.mxu0 0.0
        %446 = vmatpush1.xpose.msra.mxu0 0.0
        %447 = vmatprep.subr.mxu0 0.0
        %448 = vmatpush1.xpose.msra.mxu0 0.0
        %449 = vmatprep.subr.mxu0 0.0
        %450 = vmatpush1.xpose.msra.mxu0 0.0
        %451 = vmatprep.subr.mxu0 0.0
        %452 = vmatpush1.xpose.msra.mxu0 0.0
        %453 = vmatprep.subr.mxu0 0.0
        %454 = vmatpush1.xpose.msra.mxu0 0.0
        %455 = vmatprep.subr.mxu0 0.0
        %456 = vmatpush1.xpose.msra.mxu0 0.0
        %457 = vmatprep.subr.mxu0 0.0
        %458 = vmatpush1.xpose.msra.mxu0 0.0
        %459 = vmatprep.subr.mxu0 0.0
        %460 = vmatpush1.xpose.msra.mxu0 0.0
        %461 = vmatprep.subr.mxu0 0.0
        %462 = vmatpush1.xpose.msra.mxu0 0.0
        %463 = vmatprep.subr.mxu0 0.0
        %464 = vmatpush1.xpose.msra.mxu0 0.0
        %465 = vmatprep.subr.mxu0 0.0
        %466 = vmatpush1.xpose.msra.mxu0 0.0
        %467 = vmatprep.subr.mxu0 0.0
        %468 = vmatpush1.xpose.msra.mxu0 0.0
        %469 = vmatprep.subr.mxu0 0.0
        %470 = vmatpush1.xpose.msra.mxu0 0.0
        %471 = vmatprep.subr.mxu0 0.0
        %472 = vmatpush1.xpose.msra.mxu0 0.0
        %473 = vmatprep.subr.mxu0 0.0
        %474 = vmatpush1.xpose.msra.mxu0 0.0
        %475 = vmatprep.subr.mxu0 0.0
        %476 = vmatpush1.xpose.msra.mxu0 0.0
        %477 = vmatprep.subr.mxu0 0.0
        %478 = vmatpush1.xpose.msra.mxu0 0.0
        %479 = vmatprep.subr.mxu0 0.0
        %480 = vmatpush1.xpose.msra.mxu0 0.0
        %481 = vmatprep.subr.mxu0 0.0
        %482 = vmatpush1.xpose.msra.mxu0 0.0
        %483 = vmatprep.subr.mxu0 0.0
        %484 = vmatpush1.xpose.msra.mxu0 0.0
        %485 = vmatprep.subr.mxu0 0.0
        %486 = vmatpush1.xpose.msra.mxu0 0.0
        %487 = vmatprep.subr.mxu0 0.0
        %488 = vmatpush1.xpose.msra.mxu0 0.0
        %489 = vmatprep.subr.mxu0 0.0
        %490 = vmatpush1.xpose.msra.mxu0 0.0
        %491 = vmatprep.subr.mxu0 0.0
        %492 = vmatpush1.xpose.msra.mxu0 0.0
        %493 = vmatprep.subr.mxu0 0.0
        %494 = vmatpush1.xpose.msra.mxu0 0.0
        %495 = vmatprep.mubr.f32.mxu0 %v351
        %496 = vmatmul.mubr.f32.gmra.mrb[0].mxu0 %v350
        %v497 = vpop.f32.mrb[0].mxu0
        %v498 = vadd.f32 %v423, %v497
        %v499 = vpop.f32.mrb[0].mxu0
        %500 = vmatprep.mubr.f32.mxu0 %v355
        %501 = vmatmul.mubr.f32.gmra.mrb[0].mxu0 %v354
        %v502 = vpop.f32.mrb[0].mxu0
        %v503 = vadd.f32 %v428, %v502
        %v504 = vpop.f32.mrb[0].mxu0
        %505 = vdwg.mxu0
        %v506 = vrsqrt.pop %v498
        %v507 = vmul.f32 %v498, %v506
        %vm508 = vcmp.eq.f32.partialorder %v498, inf
        %v509 = vsel %vm508, %v498, %v507
        %vm510 = vcmp.eq.f32.partialorder %v498, 0.0
        %v511 = vand.u32 %v498, 2147483648
        %v512 = vsel %vm510, %v511, %v509
        %v513 = vrsqrt.pop %v503
        %v514 = vmul.f32 %v503, %v513
        %vm515 = vcmp.eq.f32.partialorder %v503, inf
        %v516 = vsel %vm515, %v503, %v514
        %vm517 = vcmp.eq.f32.partialorder %v503, 0.0
        %v518 = vand.u32 %v503, 2147483648
        %v519 = vsel %vm517, %v518, %v516
        %v520 = vmax.f32 %v512, 1e-15
        %v521 = vmax.f32 %v519, 1e-15
        %v522 = vmax.f32 %v520, -0.9999999
        %v523 = vmax.f32 %v521, -0.9999999
        %v524 = vmin.f32 %v522, 0.9999999
        %v525 = vmin.f32 %v523, 0.9999999
        %v526 = vadd.f32 %v524, 1.0
        %v527 = vadd.f32 %v525, 1.0
        %v528 = vsub.f32 1.0, %v524
        %v529 = vsub.f32 1.0, %v525
        %v530 = vrcp.pop %v528
        %v531 = vmul.f32 %v526, %v530
        %v532 = vrcp.pop %v529
        %v533 = vmul.f32 %v527, %v532
        %v534 = vlog2.pop %v531
        %v535 = vmul.f32 %v534, 0.6931472
        %v536 = vlog2.pop %v533
        %v537 = vmul.f32 %v536, 0.6931472
        %v538 = vmul.f32 %v535, 0.5
        %v539 = vmul.f32 %v537, 0.5
        %v540 = vrcp.pop %v520
        %v541 = vmul.f32 %v538, %v540
        %v542 = vrcp.pop %v521
        %v543 = vmul.f32 %v539, %v542
        %vm544 = vcmask 146432
        %v546 = vsel %vm544, %v541, 0
        %v549 = vsel %vm544, %v543, 0
        %vm551 = vcmask 1041408
        %v553 = vsel %vm551, %v344, 0
        %v556 = vsel %vm551, %v345, 0
        %v559 = vsel %vm551, %v346, 0
        %v562 = vsel %vm551, %v347, 0
        %564 = vmatprep.subr.mxu0 %v337
        %565 = vmatpush1.msra.mxu0 %v336
        %566 = vmatprep.subr.mxu0 %v341
        %567 = vmatpush1.msra.mxu0 %v340
        %568 = vmatprep.subr.mxu0 %v556
        %569 = vmatpush1.msra.mxu0 %v553
        %570 = vmatprep.subr.mxu0 0.0
        %571 = vmatpush1.msra.mxu0 0.0
        %572 = vmatprep.subr.mxu0 0.0
        %573 = vmatpush1.msra.mxu0 0.0
        %574 = vmatprep.subr.mxu0 0.0
        %575 = vmatpush1.msra.mxu0 0.0
        %576 = vmatprep.subr.mxu0 0.0
        %577 = vmatpush1.msra.mxu0 0.0
        %578 = vmatprep.subr.mxu0 0.0
        %579 = vmatpush1.msra.mxu0 0.0
        %580 = vmatprep.subr.mxu0 0.0
        %581 = vmatpush1.msra.mxu0 0.0
        %582 = vmatprep.subr.mxu0 0.0
        %583 = vmatpush1.msra.mxu0 0.0
        %584 = vmatprep.subr.mxu0 0.0
        %585 = vmatpush1.msra.mxu0 0.0
        %586 = vmatprep.subr.mxu0 0.0
        %587 = vmatpush1.msra.mxu0 0.0
        %588 = vmatprep.subr.mxu0 0.0
        %589 = vmatpush1.msra.mxu0 0.0
        %590 = vmatprep.subr.mxu0 0.0
        %591 = vmatpush1.msra.mxu0 0.0
        %592 = vmatprep.subr.mxu0 0.0
        %593 = vmatpush1.msra.mxu0 0.0
        %594 = vmatprep.subr.mxu0 0.0
        %595 = vmatpush1.msra.mxu0 0.0
        %596 = vmatprep.subr.mxu0 0.0
        %597 = vmatpush1.msra.mxu0 0.0
        %598 = vmatprep.subr.mxu0 0.0
        %599 = vmatpush1.msra.mxu0 0.0
        %600 = vmatprep.subr.mxu0 0.0
        %601 = vmatpush1.msra.mxu0 0.0
        %602 = vmatprep.subr.mxu0 0.0
        %603 = vmatpush1.msra.mxu0 0.0
        %604 = vmatprep.subr.mxu0 0.0
        %605 = vmatpush1.msra.mxu0 0.0
        %606 = vmatprep.subr.mxu0 0.0
        %607 = vmatpush1.msra.mxu0 0.0
        %608 = vmatprep.subr.mxu0 0.0
        %609 = vmatpush1.msra.mxu0 0.0
        %610 = vmatprep.subr.mxu0 0.0
        %611 = vmatpush1.msra.mxu0 0.0
        %612 = vmatprep.subr.mxu0 0.0
        %613 = vmatpush1.msra.mxu0 0.0
        %614 = vmatprep.subr.mxu0 0.0
        %615 = vmatpush1.msra.mxu0 0.0
        %616 = vmatprep.subr.mxu0 0.0
        %617 = vmatpush1.msra.mxu0 0.0
        %618 = vmatprep.subr.mxu0 0.0
        %619 = vmatpush1.msra.mxu0 0.0
        %620 = vmatprep.subr.mxu0 0.0
        %621 = vmatpush1.msra.mxu0 0.0
        %622 = vmatprep.subr.mxu0 0.0
        %623 = vmatpush1.msra.mxu0 0.0
        %624 = vmatprep.subr.mxu0 0.0
        %625 = vmatpush1.msra.mxu0 0.0
        %626 = vmatprep.subr.mxu0 0.0
        %627 = vmatpush1.msra.mxu0 0.0
        %628 = vmatprep.mubr.f32.mxu0 0.0
        %629 = vmatmul.mubr.f32.gmra.mrb[0].mxu0 %v546
        %v630 = vpop.f32.mrb[0].mxu0
        %v631 = vadd.f32 0.0, %v630
        %v632 = vpop.f32.mrb[0].mxu0
        %v633 = vadd.f32 0.0, %v632
        %634 = vmatprep.mubr.f32.mxu0 0.0
        %635 = vmatmul.mubr.f32.gmra.mrb[0].mxu0 %v549
        %v636 = vpop.f32.mrb[0].mxu0
        %v637 = vadd.f32 0.0, %v636
        %v638 = vpop.f32.mrb[0].mxu0
        %v639 = vadd.f32 0.0, %v638
        %640 = vdwg.mxu0
        %641 = vmatprep.subr.mxu0 %v339
        %642 = vmatpush1.msra.mxu0 %v338
        %643 = vmatprep.subr.mxu0 %v343
        %644 = vmatpush1.msra.mxu0 %v342
        %645 = vmatprep.subr.mxu0 %v562
        %646 = vmatpush1.msra.mxu0 %v559
        %647 = vmatprep.subr.mxu0 0.0
        %648 = vmatpush1.msra.mxu0 0.0
        %649 = vmatprep.subr.mxu0 0.0
        %650 = vmatpush1.msra.mxu0 0.0
        %651 = vmatprep.subr.mxu0 0.0
        %652 = vmatpush1.msra.mxu0 0.0
        %653 = vmatprep.subr.mxu0 0.0
        %654 = vmatpush1.msra.mxu0 0.0
        %655 = vmatprep.subr.mxu0 0.0
        %656 = vmatpush1.msra.mxu0 0.0
        %657 = vmatprep.subr.mxu0 0.0
        %658 = vmatpush1.msra.mxu0 0.0
        %659 = vmatprep.subr.mxu0 0.0
        %660 = vmatpush1.msra.mxu0 0.0
        %661 = vmatprep.subr.mxu0 0.0
        %662 = vmatpush1.msra.mxu0 0.0
        %663 = vmatprep.subr.mxu0 0.0
        %664 = vmatpush1.msra.mxu0 0.0
        %665 = vmatprep.subr.mxu0 0.0
        %666 = vmatpush1.msra.mxu0 0.0
        %667 = vmatprep.subr.mxu0 0.0
        %668 = vmatpush1.msra.mxu0 0.0
        %669 = vmatprep.subr.mxu0 0.0
        %670 = vmatpush1.msra.mxu0 0.0
        %671 = vmatprep.subr.mxu0 0.0
        %672 = vmatpush1.msra.mxu0 0.0
        %673 = vmatprep.subr.mxu0 0.0
        %674 = vmatpush1.msra.mxu0 0.0
        %675 = vmatprep.subr.mxu0 0.0
        %676 = vmatpush1.msra.mxu0 0.0
        %677 = vmatprep.subr.mxu0 0.0
        %678 = vmatpush1.msra.mxu0 0.0
        %679 = vmatprep.subr.mxu0 0.0
        %680 = vmatpush1.msra.mxu0 0.0
        %681 = vmatprep.subr.mxu0 0.0
        %682 = vmatpush1.msra.mxu0 0.0
        %683 = vmatprep.subr.mxu0 0.0
        %684 = vmatpush1.msra.mxu0 0.0
        %685 = vmatprep.subr.mxu0 0.0
        %686 = vmatpush1.msra.mxu0 0.0
        %687 = vmatprep.subr.mxu0 0.0
        %688 = vmatpush1.msra.mxu0 0.0
        %689 = vmatprep.subr.mxu0 0.0
        %690 = vmatpush1.msra.mxu0 0.0
        %691 = vmatprep.subr.mxu0 0.0
        %692 = vmatpush1.msra.mxu0 0.0
        %693 = vmatprep.subr.mxu0 0.0
        %694 = vmatpush1.msra.mxu0 0.0
        %695 = vmatprep.subr.mxu0 0.0
        %696 = vmatpush1.msra.mxu0 0.0
        %697 = vmatprep.subr.mxu0 0.0
        %698 = vmatpush1.msra.mxu0 0.0
        %699 = vmatprep.subr.mxu0 0.0
        %700 = vmatpush1.msra.mxu0 0.0
        %701 = vmatprep.subr.mxu0 0.0
        %702 = vmatpush1.msra.mxu0 0.0
        %703 = vmatprep.subr.mxu0 0.0
        %704 = vmatpush1.msra.mxu0 0.0
        %705 = vmatprep.mubr.f32.mxu0 0.0
        %706 = vmatmul.mubr.f32.gmra.mrb[0].mxu0 %v546
        %v707 = vpop.f32.mrb[0].mxu0
        %v708 = vadd.f32 0.0, %v707
        %v709 = vpop.f32.mrb[0].mxu0
        %v710 = vadd.f32 0.0, %v709
        %711 = vmatprep.mubr.f32.mxu0 0.0
        %712 = vmatmul.mubr.f32.gmra.mrb[0].mxu0 %v549
        %v713 = vpop.f32.mrb[0].mxu0
        %v714 = vadd.f32 0.0, %v713
        %v715 = vpop.f32.mrb[0].mxu0
        %v716 = vadd.f32 0.0, %v715
        %717 = vdwg.mxu0
        %v718 = vmul.f32 %v328, %v631
        %v719 = vmul.f32 %v329, %v633
        %v720 = vmul.f32 %v330, %v708
        %v721 = vmul.f32 %v331, %v710
        %v722 = vmul.f32 %v332, %v637
        %v723 = vmul.f32 %v333, %v639
        %v724 = vmul.f32 %v334, %v714
        %v725 = vmul.f32 %v335, %v716
        %v726 = vpack.c.bf16 %v722, %v718
        %v727 = vpack.c.bf16 %v723, %v719
        %v728 = vpack.c.bf16 %v724, %v720
        %729 = vst [vmem:[#allocation2] sm:$0xff] %v726
        %730 = vst [vmem:[#allocation2 + $0x8] sm:$0xff] %v727
        %731 = vst [vmem:[#allocation2 + $0x10] sm:$0xff] %v728
        %v732 = vpack.c.bf16 %v725, %v721
        %737 = vrot.lane.b32.xlu0 %v726, 127
        %v738 = vpop.permute.xlu0 %737
        %739 = vrot.lane.b32.xlu0 %v727, 127
        %v740 = vpop.permute.xlu0 %739
        %741 = vrot.lane.b32.xlu0 %v728, 127
        %v742 = vpop.permute.xlu0 %741
        %743 = vrot.lane.b32.xlu0 %v732, 127
        %v744 = vpop.permute.xlu0 %743
        %vm745 = vcmask 1039360
        %v746 = vsel %vm745, %v738, %v740
        %v747 = vsel %vm745, %v740, %v742
        %v748 = vsel %vm745, %v742, %v744
        %752 = vst [vmem:[#allocation2 + $0x18] sm:$0xff] %v746
        %753 = vst [vmem:[#allocation2 + $0x20] sm:$0xff] %v747
        %754 = vst [vmem:[#allocation2 + $0x28] sm:$0xff] %v748
        %755 = vrot.lane.b32.xlu0 %v726, 126
        %v756 = vpop.permute.xlu0 %755
        %757 = vrot.lane.b32.xlu0 %v727, 126
        %v758 = vpop.permute.xlu0 %757
        %759 = vrot.lane.b32.xlu0 %v728, 126
        %v760 = vpop.permute.xlu0 %759
        %761 = vrot.lane.b32.xlu0 %v732, 126
        %v762 = vpop.permute.xlu0 %761
        %vm763 = vcmask 1031168
        %v764 = vsel %vm763, %v756, %v758
        %v765 = vsel %vm763, %v758, %v760
        %v766 = vsel %vm763, %v760, %v762
        %770 = vst [vmem:[#allocation2 + $0x30] sm:$0xff] %v764
        %771 = vst [vmem:[#allocation2 + $0x38] sm:$0xff] %v765
        %772 = vst [vmem:[#allocation2 + $0x40] sm:$0xff] %v766
        %773 = vrot.lane.b32.xlu0 %v726, 110
        %v774 = vpop.permute.xlu0 %773
        %775 = vrot.lane.b32.xlu0 %v727, 110
        %v776 = vpop.permute.xlu0 %775
        %777 = vrot.lane.b32.xlu0 %v728, 110
        %v778 = vpop.permute.xlu0 %777
        %779 = vrot.lane.b32.xlu0 %v732, 110
        %v780 = vpop.permute.xlu0 %779
        %vm781 = vcmask 900096
        %v782 = vsel %vm781, %v774, %v776
        %v783 = vsel %vm781, %v776, %v778
        %v784 = vsel %vm781, %v778, %v780
        %788 = vst [vmem:[#allocation2 + $0x48] sm:$0xff] %v782
        %789 = vst [vmem:[#allocation2 + $0x50] sm:$0xff] %v783
        %790 = vst [vmem:[#allocation2 + $0x58] sm:$0xff] %v784
        %791 = vrot.lane.b32.xlu0 %v726, 109
        %v792 = vpop.permute.xlu0 %791
        %793 = vrot.lane.b32.xlu0 %v727, 109
        %v794 = vpop.permute.xlu0 %793
        %795 = vrot.lane.b32.xlu0 %v728, 109
        %v796 = vpop.permute.xlu0 %795
        %797 = vrot.lane.b32.xlu0 %v732, 109
        %v798 = vpop.permute.xlu0 %797
        %vm799 = vcmask 891904
        %v800 = vsel %vm799, %v792, %v794
        %v801 = vsel %vm799, %v794, %v796
        %v802 = vsel %vm799, %v796, %v798
        %806 = vst [vmem:[#allocation2 + $0x60] sm:$0xff] %v800
        %807 = vst [vmem:[#allocation2 + $0x68] sm:$0xff] %v801
        %808 = vst [vmem:[#allocation2 + $0x70] sm:$0xff] %v802
        %809 = vrot.lane.b32.xlu0 %v726, 108
        %v810 = vpop.permute.xlu0 %809
        %811 = vrot.lane.b32.xlu0 %v727, 108
        %v812 = vpop.permute.xlu0 %811
        %813 = vrot.lane.b32.xlu0 %v728, 108
        %v814 = vpop.permute.xlu0 %813
        %815 = vrot.lane.b32.xlu0 %v732, 108
        %v816 = vpop.permute.xlu0 %815
        %vm817 = vcmask 883712
        %v818 = vsel %vm817, %v810, %v812
        %v819 = vsel %vm817, %v812, %v814
        %v820 = vsel %vm817, %v814, %v816
        %824 = vst [vmem:[#allocation2 + $0x78] sm:$0xff] %v818
        %825 = vst [vmem:[#allocation2 + $0x80] sm:$0xff] %v819
        %826 = vst [vmem:[#allocation2 + $0x88] sm:$0xff] %v820
        %827 = vrot.lane.b32.xlu0 %v726, 92
        %v828 = vpop.permute.xlu0 %827
        %829 = vrot.lane.b32.xlu0 %v727, 92
        %v830 = vpop.permute.xlu0 %829
        %831 = vrot.lane.b32.xlu0 %v728, 92
        %v832 = vpop.permute.xlu0 %831
        %833 = vrot.lane.b32.xlu0 %v732, 92
        %v834 = vpop.permute.xlu0 %833
        %vm835 = vcmask 752640
        %v836 = vsel %vm835, %v828, %v830
        %v837 = vsel %vm835, %v830, %v832
        %v838 = vsel %vm835, %v832, %v834
        %842 = vst [vmem:[#allocation2 + $0x90] sm:$0xff] %v836
        %843 = vst [vmem:[#allocation2 + $0x98] sm:$0xff] %v837
        %844 = vst [vmem:[#allocation2 + $0xa0] sm:$0xff] %v838
        %845 = vrot.lane.b32.xlu0 %v726, 91
        %v846 = vpop.permute.xlu0 %845
        %847 = vrot.lane.b32.xlu0 %v727, 91
        %v848 = vpop.permute.xlu0 %847
        %849 = vrot.lane.b32.xlu0 %v728, 91
        %v850 = vpop.permute.xlu0 %849
        %851 = vrot.lane.b32.xlu0 %v732, 91
        %v852 = vpop.permute.xlu0 %851
        %vm853 = vcmask 744448
        %v854 = vsel %vm853, %v846, %v848
        %v855 = vsel %vm853, %v848, %v850
        %v856 = vsel %vm853, %v850, %v852
        %860 = vst [vmem:[#allocation2 + $0xa8] sm:$0xff] %v854
        %861 = vst [vmem:[#allocation2 + $0xb0] sm:$0xff] %v855
        %862 = vst [vmem:[#allocation2 + $0xb8] sm:$0xff] %v856
        %863 = vrot.lane.b32.xlu0 %v726, 90
        %v864 = vpop.permute.xlu0 %863
        %865 = vrot.lane.b32.xlu0 %v727, 90
        %v866 = vpop.permute.xlu0 %865
        %867 = vrot.lane.b32.xlu0 %v728, 90
        %v868 = vpop.permute.xlu0 %867
        %869 = vrot.lane.b32.xlu0 %v732, 90
        %v870 = vpop.permute.xlu0 %869
        %vm871 = vcmask 736256
        %v872 = vsel %vm871, %v864, %v866
        %v873 = vsel %vm871, %v866, %v868
        %v874 = vsel %vm871, %v868, %v870
        %878 = vst [vmem:[#allocation2 + $0xc0] sm:$0xff] %v872
        %879 = vst [vmem:[#allocation2 + $0xc8] sm:$0xff] %v873
        %880 = vst [vmem:[#allocation2 + $0xd0] sm:$0xff] %v874
        %v881 = vld [vmem:[%s322] sm:$0xff]
        %v882 = vld [vmem:[#allocation2] sm:$0xff]
        %v883 = vld [vmem:[#allocation2 + $0x8] sm:$0xff]
        %v884 = vld [vmem:[#allocation2 + $0x10] sm:$0xff]
        %v885 = vld [vmem:[#allocation2 + $0x18] sm:$0xff]
        %v886 = vld [vmem:[#allocation2 + $0x20] sm:$0xff]
        %v887 = vld [vmem:[#allocation2 + $0x28] sm:$0xff]
        %v888 = vld [vmem:[#allocation2 + $0x30] sm:$0xff]
        %v889 = vld [vmem:[#allocation2 + $0x38] sm:$0xff]
        %v890 = vld [vmem:[#allocation2 + $0x40] sm:$0xff]
        %v891 = vld [vmem:[#allocation2 + $0x48] sm:$0xff]
        %v892 = vld [vmem:[#allocation2 + $0x50] sm:$0xff]
        %v893 = vld [vmem:[#allocation2 + $0x58] sm:$0xff]
        %v894 = vld [vmem:[#allocation2 + $0x60] sm:$0xff]
        %v895 = vld [vmem:[#allocation2 + $0x68] sm:$0xff]
        %v896 = vld [vmem:[#allocation2 + $0x70] sm:$0xff]
        %v897 = vld [vmem:[#allocation2 + $0x78] sm:$0xff]
        %v898 = vld [vmem:[#allocation2 + $0x80] sm:$0xff]
        %v899 = vld [vmem:[#allocation2 + $0x88] sm:$0xff]
        %v900 = vld [vmem:[#allocation2 + $0x90] sm:$0xff]
        %v901 = vld [vmem:[#allocation2 + $0x98] sm:$0xff]
        %v902 = vld [vmem:[#allocation2 + $0xa0] sm:$0xff]
        %v903 = vld [vmem:[#allocation2 + $0xa8] sm:$0xff]
        %v904 = vld [vmem:[#allocation2 + $0xb0] sm:$0xff]
        %v905 = vld [vmem:[#allocation2 + $0xb8] sm:$0xff]
        %v906 = vld [vmem:[#allocation2 + $0xc0] sm:$0xff]
        %v907 = vld [vmem:[#allocation2 + $0xc8] sm:$0xff]
        %v908 = vld [vmem:[#allocation2 + $0xd0] sm:$0xff]
        %v909 = vld [vmem:[%s326] sm:$0xff]
        %911 = vset.pattern.permute.xlu0 0
        %912 = vperm.xlu0 %911, %v909
        %v913 = vpop.permute.xlu0 %912
        %v916 = vunpack.c.l.b16 %v881
        %v917 = vunpack.c.h.b16 %v881
        %v918 = vpack.c.b16 %v916, %v916
        %v919 = vpack.c.b16 %v917, %v917
        %vm921 = vcmask 130048
        %v923 = vsel %vm921, %v919, 0
        %925 = vmatprep.subr.bf16.mxu0 %v883
        %926 = vmatpush1.bf16.msra.mxu0 %v882
        %927 = vmatprep.subr.bf16.mxu0 %v886
        %928 = vmatpush1.bf16.msra.mxu0 %v885
        %929 = vmatprep.subr.bf16.mxu0 %v889
        %930 = vmatpush1.bf16.msra.mxu0 %v888
        %931 = vmatprep.subr.bf16.mxu0 %v892
        %932 = vmatpush1.bf16.msra.mxu0 %v891
        %933 = vmatprep.subr.bf16.mxu0 %v895
        %934 = vmatpush1.bf16.msra.mxu0 %v894
        %935 = vmatprep.subr.bf16.mxu0 %v898
        %936 = vmatpush1.bf16.msra.mxu0 %v897
        %937 = vmatprep.subr.bf16.mxu0 %v901
        %938 = vmatpush1.bf16.msra.mxu0 %v900
        %939 = vmatprep.subr.bf16.mxu0 %v904
        %940 = vmatpush1.bf16.msra.mxu0 %v903
        %941 = vmatprep.subr.bf16.mxu0 %v907
        %942 = vmatpush1.bf16.msra.mxu0 %v906
        %943 = vmatprep.subr.bf16.mxu0 0
        %944 = vmatpush1.bf16.msra.mxu0 0
        %945 = vmatprep.subr.bf16.mxu0 0
        %946 = vmatpush1.bf16.msra.mxu0 0
        %947 = vmatprep.subr.bf16.mxu0 0
        %948 = vmatpush1.bf16.msra.mxu0 0
        %949 = vmatprep.subr.bf16.mxu0 0
        %950 = vmatpush1.bf16.msra.mxu0 0
        %951 = vmatprep.subr.bf16.mxu0 0
        %952 = vmatpush1.bf16.msra.mxu0 0
        %953 = vmatprep.subr.bf16.mxu0 0
        %954 = vmatpush1.bf16.msra.mxu0 0
        %955 = vmatprep.subr.bf16.mxu0 0
        %956 = vmatpush1.bf16.msra.mxu0 0
        %957 = vmatprep.mubr.bf16.mxu0 %v923
        %958 = vmatmul.mubr.bf16.gmra.mrb[0].mxu0 %v918
        %v959 = vpop.f32.mrb[0].mxu0
        %v960 = vadd.f32 %v913, %v959
        %v961 = vpop.f32.mrb[0].mxu0
        %v962 = vadd.f32 %v913, %v961
        %v963 = vpop.f32.mrb[0].mxu0
        %v964 = vpop.f32.mrb[0].mxu0
        %965 = vdwg.mxu0
        %966 = vmatprep.subr.bf16.mxu0 0
        %967 = vmatpush1.bf16.msra.mxu0 %v884
        %968 = vmatprep.subr.bf16.mxu0 0
        %969 = vmatpush1.bf16.msra.mxu0 %v887
        %970 = vmatprep.subr.bf16.mxu0 0
        %971 = vmatpush1.bf16.msra.mxu0 %v890
        %972 = vmatprep.subr.bf16.mxu0 0
        %973 = vmatpush1.bf16.msra.mxu0 %v893
        %974 = vmatprep.subr.bf16.mxu0 0
        %975 = vmatpush1.bf16.msra.mxu0 %v896
        %976 = vmatprep.subr.bf16.mxu0 0
        %977 = vmatpush1.bf16.msra.mxu0 %v899
        %978 = vmatprep.subr.bf16.mxu0 0
        %979 = vmatpush1.bf16.msra.mxu0 %v902
        %980 = vmatprep.subr.bf16.mxu0 0
        %981 = vmatpush1.bf16.msra.mxu0 %v905
        %982 = vmatprep.subr.bf16.mxu0 0
        %983 = vmatpush1.bf16.msra.mxu0 %v908
        %984 = vmatprep.subr.bf16.mxu0 0
        %985 = vmatpush1.bf16.msra.mxu0 0
        %986 = vmatprep.subr.bf16.mxu0 0
        %987 = vmatpush1.bf16.msra.mxu0 0
        %988 = vmatprep.subr.bf16.mxu0 0
        %989 = vmatpush1.bf16.msra.mxu0 0
        %990 = vmatprep.subr.bf16.mxu0 0
        %991 = vmatpush1.bf16.msra.mxu0 0
        %992 = vmatprep.subr.bf16.mxu0 0
        %993 = vmatpush1.bf16.msra.mxu0 0
        %994 = vmatprep.subr.bf16.mxu0 0
        %995 = vmatpush1.bf16.msra.mxu0 0
        %996 = vmatprep.subr.bf16.mxu0 0
        %997 = vmatpush1.bf16.msra.mxu0 0
        %998 = vmatprep.mubr.bf16.mxu0 %v923
        %999 = vmatmul.mubr.bf16.gmra.mrb[0].mxu0 %v918
        %v1000 = vpop.f32.mrb[0].mxu0
        %v1001 = vadd.f32 %v913, %v1000
        %v1002 = vpop.f32.mrb[0].mxu0
        %v1003 = vpop.f32.mrb[0].mxu0
        %v1004 = vpop.f32.mrb[0].mxu0
        %1005 = vdwg.mxu0
        %v1006 = vld [vmem:[#allocation8] sm:$0xff]
        %v1007 = vld [vmem:[#allocation8 + $0x8] sm:$0xff]
        %v1008 = vld [vmem:[#allocation8 + $0x10] sm:$0xff]
        %v1009 = vld [vmem:[#allocation8 + $0x18] sm:$0xff]
        %v1010 = vld [vmem:[#allocation8 + $0x20] sm:$0xff]
        %v1011 = vld [vmem:[#allocation8 + $0x28] sm:$0xff]
        %v1012 = vmul.f32 %v960, %v960
        %v1013 = vmul.f32 %v962, %v962
        %v1014 = vmul.f32 %v1001, %v1001
        %1015 = vmatprep.subr.mxu0 %v1007
        %1016 = vmatpush1.xpose.msra.mxu0 %v1006
        %1017 = vmatprep.subr.mxu0 %v1010
        %1018 = vmatpush1.xpose.msra.mxu0 %v1009
        %1019 = vmatprep.subr.mxu0 0.0
        %1020 = vmatpush1.xpose.msra.mxu0 0.0
        %1021 = vmatprep.subr.mxu0 0.0
        %1022 = vmatpush1.xpose.msra.mxu0 0.0
        %1023 = vmatprep.subr.mxu0 0.0
        %1024 = vmatpush1.xpose.msra.mxu0 0.0
        %1025 = vmatprep.subr.mxu0 0.0
        %1026 = vmatpush1.xpose.msra.mxu0 0.0
        %1027 = vmatprep.subr.mxu0 0.0
        %1028 = vmatpush1.xpose.msra.mxu0 0.0
        %1029 = vmatprep.subr.mxu0 0.0
        %1030 = vmatpush1.xpose.msra.mxu0 0.0
        %1031 = vmatprep.subr.mxu0 0.0
        %1032 = vmatpush1.xpose.msra.mxu0 0.0
        %1033 = vmatprep.subr.mxu0 0.0
        %1034 = vmatpush1.xpose.msra.mxu0 0.0
        %1035 = vmatprep.subr.mxu0 0.0
        %1036 = vmatpush1.xpose.msra.mxu0 0.0
        %1037 = vmatprep.subr.mxu0 0.0
        %1038 = vmatpush1.xpose.msra.mxu0 0.0
        %1039 = vmatprep.subr.mxu0 0.0
        %1040 = vmatpush1.xpose.msra.mxu0 0.0
        %1041 = vmatprep.subr.mxu0 0.0
        %1042 = vmatpush1.xpose.msra.mxu0 0.0
        %1043 = vmatprep.subr.mxu0 0.0
        %1044 = vmatpush1.xpose.msra.mxu0 0.0
        %1045 = vmatprep.subr.mxu0 0.0
        %1046 = vmatpush1.xpose.msra.mxu0 0.0
        %1047 = vmatprep.subr.mxu0 0.0
        %1048 = vmatpush1.xpose.msra.mxu0 0.0
        %1049 = vmatprep.subr.mxu0 0.0
        %1050 = vmatpush1.xpose.msra.mxu0 0.0
        %1051 = vmatprep.subr.mxu0 0.0
        %1052 = vmatpush1.xpose.msra.mxu0 0.0
        %1053 = vmatprep.subr.mxu0 0.0
        %1054 = vmatpush1.xpose.msra.mxu0 0.0
        %1055 = vmatprep.subr.mxu0 0.0
        %1056 = vmatpush1.xpose.msra.mxu0 0.0
        %1057 = vmatprep.subr.mxu0 0.0
        %1058 = vmatpush1.xpose.msra.mxu0 0.0
        %1059 = vmatprep.subr.mxu0 0.0
        %1060 = vmatpush1.xpose.msra.mxu0 0.0
        %1061 = vmatprep.subr.mxu0 0.0
        %1062 = vmatpush1.xpose.msra.mxu0 0.0
        %1063 = vmatprep.subr.mxu0 0.0
        %1064 = vmatpush1.xpose.msra.mxu0 0.0
        %1065 = vmatprep.subr.mxu0 0.0
        %1066 = vmatpush1.xpose.msra.mxu0 0.0
        %1067 = vmatprep.subr.mxu0 0.0
        %1068 = vmatpush1.xpose.msra.mxu0 0.0
        %1069 = vmatprep.subr.mxu0 0.0
        %1070 = vmatpush1.xpose.msra.mxu0 0.0
        %1071 = vmatprep.subr.mxu0 0.0
        %1072 = vmatpush1.xpose.msra.mxu0 0.0
        %1073 = vmatprep.subr.mxu0 0.0
        %1074 = vmatpush1.xpose.msra.mxu0 0.0
        %1075 = vmatprep.subr.mxu0 0.0
        %1076 = vmatpush1.xpose.msra.mxu0 0.0
        %1077 = vmatprep.subr.mxu0 0.0
        %1078 = vmatpush1.xpose.msra.mxu0 0.0
        %1079 = vmatprep.mubr.f32.mxu0 %v1013
        %1080 = vmatmul.mubr.f32.gmra.mrb[0].mxu0 %v1012
        %v1081 = vpop.f32.mrb[0].mxu0
        %v1082 = vadd.f32 0.0, %v1081
        %v1083 = vpop.f32.mrb[0].mxu0
        %1084 = vdwg.mxu0
        %1085 = vmatprep.subr.mxu0 0.0
        %1086 = vmatpush1.xpose.msra.mxu0 %v1008
        %1087 = vmatprep.subr.mxu0 0.0
        %1088 = vmatpush1.xpose.msra.mxu0 %v1011
        %1089 = vmatprep.subr.mxu0 0.0
        %1090 = vmatpush1.xpose.msra.mxu0 0.0
        %1091 = vmatprep.subr.mxu0 0.0
        %1092 = vmatpush1.xpose.msra.mxu0 0.0
        %1093 = vmatprep.subr.mxu0 0.0
        %1094 = vmatpush1.xpose.msra.mxu0 0.0
        %1095 = vmatprep.subr.mxu0 0.0
        %1096 = vmatpush1.xpose.msra.mxu0 0.0
        %1097 = vmatprep.subr.mxu0 0.0
        %1098 = vmatpush1.xpose.msra.mxu0 0.0
        %1099 = vmatprep.subr.mxu0 0.0
        %1100 = vmatpush1.xpose.msra.mxu0 0.0
        %1101 = vmatprep.subr.mxu0 0.0
        %1102 = vmatpush1.xpose.msra.mxu0 0.0
        %1103 = vmatprep.subr.mxu0 0.0
        %1104 = vmatpush1.xpose.msra.mxu0 0.0
        %1105 = vmatprep.subr.mxu0 0.0
        %1106 = vmatpush1.xpose.msra.mxu0 0.0
        %1107 = vmatprep.subr.mxu0 0.0
        %1108 = vmatpush1.xpose.msra.mxu0 0.0
        %1109 = vmatprep.subr.mxu0 0.0
        %1110 = vmatpush1.xpose.msra.mxu0 0.0
        %1111 = vmatprep.subr.mxu0 0.0
        %1112 = vmatpush1.xpose.msra.mxu0 0.0
        %1113 = vmatprep.subr.mxu0 0.0
        %1114 = vmatpush1.xpose.msra.mxu0 0.0
        %1115 = vmatprep.subr.mxu0 0.0
        %1116 = vmatpush1.xpose.msra.mxu0 0.0
        %1117 = vmatprep.subr.mxu0 0.0
        %1118 = vmatpush1.xpose.msra.mxu0 0.0
        %1119 = vmatprep.subr.mxu0 0.0
        %1120 = vmatpush1.xpose.msra.mxu0 0.0
        %1121 = vmatprep.subr.mxu0 0.0
        %1122 = vmatpush1.xpose.msra.mxu0 0.0
        %1123 = vmatprep.subr.mxu0 0.0
        %1124 = vmatpush1.xpose.msra.mxu0 0.0
        %1125 = vmatprep.subr.mxu0 0.0
        %1126 = vmatpush1.xpose.msra.mxu0 0.0
        %1127 = vmatprep.subr.mxu0 0.0
        %1128 = vmatpush1.xpose.msra.mxu0 0.0
        %1129 = vmatprep.subr.mxu0 0.0
        %1130 = vmatpush1.xpose.msra.mxu0 0.0
        %1131 = vmatprep.subr.mxu0 0.0
        %1132 = vmatpush1.xpose.msra.mxu0 0.0
        %1133 = vmatprep.subr.mxu0 0.0
        %1134 = vmatpush1.xpose.msra.mxu0 0.0
        %1135 = vmatprep.subr.mxu0 0.0
        %1136 = vmatpush1.xpose.msra.mxu0 0.0
        %1137 = vmatprep.subr.mxu0 0.0
        %1138 = vmatpush1.xpose.msra.mxu0 0.0
        %1139 = vmatprep.subr.mxu0 0.0
        %1140 = vmatpush1.xpose.msra.mxu0 0.0
        %1141 = vmatprep.subr.mxu0 0.0
        %1142 = vmatpush1.xpose.msra.mxu0 0.0
        %1143 = vmatprep.subr.mxu0 0.0
        %1144 = vmatpush1.xpose.msra.mxu0 0.0
        %1145 = vmatprep.subr.mxu0 0.0
        %1146 = vmatpush1.xpose.msra.mxu0 0.0
        %1147 = vmatprep.subr.mxu0 0.0
        %1148 = vmatpush1.xpose.msra.mxu0 0.0
        %1149 = vmatprep.mubr.f32.mxu0 0.0
        %1150 = vmatmul.mubr.f32.gmra.mrb[0].mxu0 %v1014
        %v1151 = vpop.f32.mrb[0].mxu0
        %v1152 = vadd.f32 %v1082, %v1151
        %v1153 = vpop.f32.mrb[0].mxu0
        %1154 = vdwg.mxu0
        %v1155 = vrsqrt.pop %v1152
        %v1156 = vmul.f32 %v1152, %v1155
        %vm1157 = vcmp.eq.f32.partialorder %v1152, inf
        %v1158 = vsel %vm1157, %v1152, %v1156
        %vm1159 = vcmp.eq.f32.partialorder %v1152, 0.0
        %v1160 = vand.u32 %v1152, 2147483648
        %v1161 = vsel %vm1159, %v1160, %v1158
        %v1162 = vmax.f32 %v1161, 1e-15
        %v1163 = vmax.f32 %v1162, -15.0
        %v1164 = vmin.f32 %v1163, 15.0
        %v1165 = vtanh.pop %v1164
        %v1166 = vrcp.pop %v1162
        %v1167 = vmul.f32 %v1165, %v1166
        %v1169 = vsel %vm921, %v1167, 0
        %1171 = vmatprep.subr.mxu0 %v1007
        %1172 = vmatpush1.msra.mxu0 %v1006
        %1173 = vmatprep.subr.mxu0 %v1010
        %1174 = vmatpush1.msra.mxu0 %v1009
        %1175 = vmatprep.subr.mxu0 0.0
        %1176 = vmatpush1.msra.mxu0 0.0
        %1177 = vmatprep.subr.mxu0 0.0
        %1178 = vmatpush1.msra.mxu0 0.0
        %1179 = vmatprep.subr.mxu0 0.0
        %1180 = vmatpush1.msra.mxu0 0.0
        %1181 = vmatprep.subr.mxu0 0.0
        %1182 = vmatpush1.msra.mxu0 0.0
        %1183 = vmatprep.subr.mxu0 0.0
        %1184 = vmatpush1.msra.mxu0 0.0
        %1185 = vmatprep.subr.mxu0 0.0
        %1186 = vmatpush1.msra.mxu0 0.0
        %1187 = vmatprep.subr.mxu0 0.0
        %1188 = vmatpush1.msra.mxu0 0.0
        %1189 = vmatprep.subr.mxu0 0.0
        %1190 = vmatpush1.msra.mxu0 0.0
        %1191 = vmatprep.subr.mxu0 0.0
        %1192 = vmatpush1.msra.mxu0 0.0
        %1193 = vmatprep.subr.mxu0 0.0
        %1194 = vmatpush1.msra.mxu0 0.0
        %1195 = vmatprep.subr.mxu0 0.0
        %1196 = vmatpush1.msra.mxu0 0.0
        %1197 = vmatprep.subr.mxu0 0.0
        %1198 = vmatpush1.msra.mxu0 0.0
        %1199 = vmatprep.subr.mxu0 0.0
        %1200 = vmatpush1.msra.mxu0 0.0
        %1201 = vmatprep.subr.mxu0 0.0
        %1202 = vmatpush1.msra.mxu0 0.0
        %1203 = vmatprep.subr.mxu0 0.0
        %1204 = vmatpush1.msra.mxu0 0.0
        %1205 = vmatprep.subr.mxu0 0.0
        %1206 = vmatpush1.msra.mxu0 0.0
        %1207 = vmatprep.subr.mxu0 0.0
        %1208 = vmatpush1.msra.mxu0 0.0
        %1209 = vmatprep.subr.mxu0 0.0
        %1210 = vmatpush1.msra.mxu0 0.0
        %1211 = vmatprep.subr.mxu0 0.0
        %1212 = vmatpush1.msra.mxu0 0.0
        %1213 = vmatprep.subr.mxu0 0.0
        %1214 = vmatpush1.msra.mxu0 0.0
        %1215 = vmatprep.subr.mxu0 0.0
        %1216 = vmatpush1.msra.mxu0 0.0
        %1217 = vmatprep.subr.mxu0 0.0
        %1218 = vmatpush1.msra.mxu0 0.0
        %1219 = vmatprep.subr.mxu0 0.0
        %1220 = vmatpush1.msra.mxu0 0.0
        %1221 = vmatprep.subr.mxu0 0.0
        %1222 = vmatpush1.msra.mxu0 0.0
        %1223 = vmatprep.subr.mxu0 0.0
        %1224 = vmatpush1.msra.mxu0 0.0
        %1225 = vmatprep.subr.mxu0 0.0
        %1226 = vmatpush1.msra.mxu0 0.0
        %1227 = vmatprep.subr.mxu0 0.0
        %1228 = vmatpush1.msra.mxu0 0.0
        %1229 = vmatprep.subr.mxu0 0.0
        %1230 = vmatpush1.msra.mxu0 0.0
        %1231 = vmatprep.subr.mxu0 0.0
        %1232 = vmatpush1.msra.mxu0 0.0
        %1233 = vmatprep.subr.mxu0 0.0
        %1234 = vmatpush1.msra.mxu0 0.0
        %1235 = vmatprep.mubr.f32.mxu0 0.0
        %1236 = vmatmul.mubr.f32.gmra.mrb[0].mxu0 %v1169
        %v1237 = vpop.f32.mrb[0].mxu0
        %v1238 = vadd.f32 0.0, %v1237
        %v1239 = vpop.f32.mrb[0].mxu0
        %v1240 = vadd.f32 0.0, %v1239
        %1241 = vdwg.mxu0
        %1242 = vmatprep.subr.mxu0 0.0
        %1243 = vmatpush1.msra.mxu0 %v1008
        %1244 = vmatprep.subr.mxu0 0.0
        %1245 = vmatpush1.msra.mxu0 %v1011
        %1246 = vmatprep.subr.mxu0 0.0
        %1247 = vmatpush1.msra.mxu0 0.0
        %1248 = vmatprep.subr.mxu0 0.0
        %1249 = vmatpush1.msra.mxu0 0.0
        %1250 = vmatprep.subr.mxu0 0.0
        %1251 = vmatpush1.msra.mxu0 0.0
        %1252 = vmatprep.subr.mxu0 0.0
        %1253 = vmatpush1.msra.mxu0 0.0
        %1254 = vmatprep.subr.mxu0 0.0
        %1255 = vmatpush1.msra.mxu0 0.0
        %1256 = vmatprep.subr.mxu0 0.0
        %1257 = vmatpush1.msra.mxu0 0.0
        %1258 = vmatprep.subr.mxu0 0.0
        %1259 = vmatpush1.msra.mxu0 0.0
        %1260 = vmatprep.subr.mxu0 0.0
        %1261 = vmatpush1.msra.mxu0 0.0
        %1262 = vmatprep.subr.mxu0 0.0
        %1263 = vmatpush1.msra.mxu0 0.0
        %1264 = vmatprep.subr.mxu0 0.0
        %1265 = vmatpush1.msra.mxu0 0.0
        %1266 = vmatprep.subr.mxu0 0.0
        %1267 = vmatpush1.msra.mxu0 0.0
        %1268 = vmatprep.subr.mxu0 0.0
        %1269 = vmatpush1.msra.mxu0 0.0
        %1270 = vmatprep.subr.mxu0 0.0
        %1271 = vmatpush1.msra.mxu0 0.0
        %1272 = vmatprep.subr.mxu0 0.0
        %1273 = vmatpush1.msra.mxu0 0.0
        %1274 = vmatprep.subr.mxu0 0.0
        %1275 = vmatpush1.msra.mxu0 0.0
        %1276 = vmatprep.subr.mxu0 0.0
        %1277 = vmatpush1.msra.mxu0 0.0
        %1278 = vmatprep.subr.mxu0 0.0
        %1279 = vmatpush1.msra.mxu0 0.0
        %1280 = vmatprep.subr.mxu0 0.0
        %1281 = vmatpush1.msra.mxu0 0.0
        %1282 = vmatprep.subr.mxu0 0.0
        %1283 = vmatpush1.msra.mxu0 0.0
        %1284 = vmatprep.subr.mxu0 0.0
        %1285 = vmatpush1.msra.mxu0 0.0
        %1286 = vmatprep.subr.mxu0 0.0
        %1287 = vmatpush1.msra.mxu0 0.0
        %1288 = vmatprep.subr.mxu0 0.0
        %1289 = vmatpush1.msra.mxu0 0.0
        %1290 = vmatprep.subr.mxu0 0.0
        %1291 = vmatpush1.msra.mxu0 0.0
        %1292 = vmatprep.subr.mxu0 0.0
        %1293 = vmatpush1.msra.mxu0 0.0
        %1294 = vmatprep.subr.mxu0 0.0
        %1295 = vmatpush1.msra.mxu0 0.0
        %1296 = vmatprep.subr.mxu0 0.0
        %1297 = vmatpush1.msra.mxu0 0.0
        %1298 = vmatprep.subr.mxu0 0.0
        %1299 = vmatpush1.msra.mxu0 0.0
        %1300 = vmatprep.subr.mxu0 0.0
        %1301 = vmatpush1.msra.mxu0 0.0
        %1302 = vmatprep.subr.mxu0 0.0
        %1303 = vmatpush1.msra.mxu0 0.0
        %1304 = vmatprep.subr.mxu0 0.0
        %1305 = vmatpush1.msra.mxu0 0.0
        %1306 = vmatprep.mubr.f32.mxu0 0.0
        %1307 = vmatmul.mubr.f32.gmra.mrb[0].mxu0 %v1169
        %v1308 = vpop.f32.mrb[0].mxu0
        %v1309 = vadd.f32 0.0, %v1308
        %v1310 = vpop.f32.mrb[0].mxu0
        %1311 = vdwg.mxu0
        %v1312 = vmul.f32 %v960, %v1238
        %v1313 = vmul.f32 %v962, %v1240
        %v1314 = vmul.f32 %v1001, %v1309
        %1315 = vst [vmem:[%s317] sm:$0xff] %v1312
        %1316 = vst [vmem:[%s317 + $0x8] sm:$0xff] %v1313
        %1317 = vst [vmem:[%s317 + $0x10] sm:$0xff] %v1314
        %s1318 = sand.u32 %s167, 1
        %s1319 = scalar_lea.sflag [#allocation5], %s1318
        %s1320 = sand.u32 %s167, 1
        %s1321 = smul.addr %s1320, 24
        %s1322 = scalar_lea.vmem [#allocation9], %s1321
        // Predicated region
        $region53: #{tpu_custom_call.1} parent=39 // pred_check
          %p1323 = pneg %p177
        $region54: #{tpu_custom_call.1} parent=39 // pred_check_branch
          %1325 = sbr.rel (%p1323) target = $region56
        $region55: #{tpu_custom_call.1} parent=39 // pred_region
          %s1327 = ssub.s32 384, 384
          %1328 = vsyncadd %s1319, %s1327
          %s1329 = smul.addr %s27, 3
          %s1330 = smul.addr %s28, 3
          %s1331 = sadd.s32 %s1329, %s1330
          %s1332 = smul.addr %s1331, 128
          %s1333 = scalar_lea.hbm %s5, %s1332
          %s1335 = sshll.u32 %s1322, 4
          %s1336 = int_to_ptr.vmem [resolvable:$true] %s1335
          %1338 = dma.vmem_to_hbm [thread:$0]  %s1336, 384, %s1333, %s1319
        $region56: #{tpu_custom_call.1} parent=39 // pred_fallthru
          _
      $region40: #{tpu_custom_call.1} parent=5 // pred_fallthru
        _
      %p1339 = scmp.le.s32.totalorder 2, %s18
      // Predicated region
      $region57: #{tpu_custom_call.1} parent=5 // pred_check
        %p1340 = pneg %p1339
      $region58: #{tpu_custom_call.1} parent=5 // pred_check_branch
        %1342 = sbr.rel (%p1340) target = $region60
      $region59: #{tpu_custom_call.1} parent=5 // pred_region
        %s1343 = ssub.s32 %s18, 2
        // Predicated region
        $region61: #{tpu_custom_call.1} parent=59 // pred_check
          %p1344 = pneg %p183
        $region62: #{tpu_custom_call.1} parent=59 // pred_check_branch
          %1346 = sbr.rel (%p1344) target = $region64
        $region63: #{tpu_custom_call.1} parent=59 // pred_region
          %s1347 = sand.u32 %s168, 1
          %s1348 = scalar_lea.sflag [#allocation5], %s1347
          %s1349 = sand.u32 %s168, 1
          %s1350 = smul.addr %s1349, 24
          %s1351 = scalar_lea.vmem [#allocation9], %s1350
          %1352 = dma.done %s1348, 384
        $region64: #{tpu_custom_call.1} parent=59 // pred_fallthru
          _
      $region60: #{tpu_custom_call.1} parent=5 // pred_fallthru
        _
    $region6: #{tpu_custom_call.1} parent=1 // loop_footer
      %s22 = sadd.s32 1, %s18
    $region7: #{tpu_custom_call.1} parent=1 // loop_footer_branch
      %17 = sbr.rel target = $region3
    $region8: #{tpu_custom_call.1} parent=1 // loop_exit
      _
    %1353 = vsyncpa [#allocation4], 1
    %s1354 = scalar_lea.sflag [#allocation4], 1
    %1355 = vsyncpa %s1354, 1
    %1356 = vsyncpa [#allocation7], 1
    %1357 = vsyncpa [#allocation5], 1
    %s1358 = scalar_lea.sflag [#allocation5], 1
    %1359 = vsyncpa %s1358, 1

</llo_original>
